<compile_context>
chip_gen: v7x
topology: tpu7x:2x2x1
jax: 0.10.0
libtpu: 0.0.40
codegen_flags: <defaults>
</compile_context>

<pallas_src>
import functools

import jax
import jax.numpy as jnp
from jax.experimental import pallas as pl
from jax.experimental.pallas import tpu as pltpu


def _mha_kernel(q_ref, k_ref, v_ref, o_ref, *, heads, head_dim, scale):
    # q_ref: [1, H, Lq, hd]   k_ref/v_ref: [1, H, Lk, hd]   o_ref: [1, Lq, H*hd]
    q = q_ref[0].astype(jnp.float32) * scale          # softmax scale folded into Q
    k = k_ref[0].astype(jnp.float32)
    v = v_ref[0].astype(jnp.float32)

    # Head-batched QK^T on the MXU: [H, Lq, hd] x [H, Lk, hd] -> [H, Lq, Lk]
    logits = jnp.einsum('hqd,hkd->hqk', q, k, preferred_element_type=jnp.float32)

    # Numerically-stable softmax over keys (equivalent to nn.Softmax(dim=-1)).
    m = jnp.max(logits, axis=-1, keepdims=True)
    p = jnp.exp(logits - m)
    denom = jnp.sum(p, axis=-1, keepdims=True)
    attn = p * pl.reciprocal(denom, approx=True)      # EUP reciprocal instead of a VPU divide

    # Head-batched attn @ V: [H, Lq, Lk] x [H, Lk, hd] -> [H, Lq, hd]
    out = jnp.einsum('hqk,hkd->hqd', attn, v, preferred_element_type=jnp.float32)
    out = out.astype(o_ref.dtype)

    # Head merge 'h q d -> q (h d)' done as static lane-slice stores into the
    # lane-dense [Lq, dim] output block (dim = heads*head_dim is a 128-multiple,
    # so the HBM writeback DMA is fully dense).
    for h in range(heads):
        o_ref[0, :, pl.ds(h * head_dim, head_dim)] = out[h]


def multi_head_attention(Q, K, V, *, heads):
    """Pallas forward of MultiHeadAttention.forward(Q, K, V); inputs are [B, L, dim]."""
    B, Lq, D = Q.shape
    Lk = K.shape[1]
    assert D % heads == 0, "dim must be divisible by heads"
    hd = D // heads
    scale = float(hd) ** -0.5   # (dim / heads) ** -0.5, applied to the logits (via Q)

    # Layout plumbing (einops 'b l (h d) -> b h l d') done in the wrapper.
    qh = Q.reshape(B, Lq, heads, hd).transpose(0, 2, 1, 3)
    kh = K.reshape(B, Lk, heads, hd).transpose(0, 2, 1, 3)
    vh = V.reshape(B, Lk, heads, hd).transpose(0, 2, 1, 3)

    kernel = functools.partial(_mha_kernel, heads=heads, head_dim=hd, scale=scale)
    grid_spec = pltpu.PrefetchScalarGridSpec(
        num_scalar_prefetch=0,
        grid=(B,),
        in_specs=[
            pl.BlockSpec((1, heads, Lq, hd), lambda b: (b, 0, 0, 0)),
            pl.BlockSpec((1, heads, Lk, hd), lambda b: (b, 0, 0, 0)),
            pl.BlockSpec((1, heads, Lk, hd), lambda b: (b, 0, 0, 0)),
        ],
        # Lane-dense output: the kernel writes the merged [Lq, dim] slab directly.
        out_specs=pl.BlockSpec((1, Lq, D), lambda b: (b, 0, 0)),
    )
    return pl.pallas_call(
        kernel,
        out_shape=jax.ShapeDtypeStruct((B, Lq, D), Q.dtype),
        grid_spec=grid_spec,
        compiler_params=pltpu.CompilerParams(dimension_semantics=("parallel",)),
    )(qh, kh, vh)


def reference_mha(Q, K, V, *, heads):
    """Pure-JAX mirror of the PyTorch forward, for a correctness check."""
    B, Lq, D = Q.shape
    Lk = K.shape[1]
    hd = D // heads
    scale = float(hd) ** -0.5
    q = Q.reshape(B, Lq, heads, hd).transpose(0, 2, 1, 3)
    k = K.reshape(B, Lk, heads, hd).transpose(0, 2, 1, 3)
    v = V.reshape(B, Lk, heads, hd).transpose(0, 2, 1, 3)
    dots = jnp.einsum('bhid,bhjd->bhij', q, k) * scale
    attn = jax.nn.softmax(dots, axis=-1)
    out = jnp.einsum('bhij,bhjd->bhid', attn, v)
    return out.transpose(0, 2, 1, 3).reshape(B, Lq, D)


if __name__ == "__main__":
    B, Lq, Lk, D, H = 2, 8, 16, 128, 8   # dim=128, heads=8 -> head_dim=16

    key = jax.random.PRNGKey(0)
    kq, kk, kv = jax.random.split(key, 3)
    Q = jax.random.normal(kq, (B, Lq, D), jnp.float32)
    K = jax.random.normal(kk, (B, Lk, D), jnp.float32)
    V = jax.random.normal(kv, (B, Lk, D), jnp.float32)

    out = multi_head_attention(Q, K, V, heads=H)
    jax.block_until_ready(out)

    ref = reference_mha(Q, K, V, heads=H)
    max_err = float(jnp.max(jnp.abs(out - ref)))
    # Tolerance budget: MXU f32 pass + EUP approximate reciprocal in the softmax normalization.
    assert max_err < 5e-3, f"mismatch vs reference: max |err| = {max_err}"

    print("KERNEL_OK")
</pallas_src>

<mosaic_0001>
module attributes {stable_mosaic.version = 11 : i64} {
  func.func @_mha_kernel(%arg0: i32, %arg1: memref<1x8x8x16xf32, #tpu.memory_space<vmem>>, %arg2: memref<1x8x16x16xf32, #tpu.memory_space<vmem>>, %arg3: memref<1x8x16x16xf32, #tpu.memory_space<vmem>>, %arg4: memref<1x8x128xf32, #tpu.memory_space<vmem>>) attributes {dimension_semantics = [#tpu.dimension_semantics<parallel>], iteration_bounds = array<i64: 2>, scalar_prefetch = 0 : i64, scratch_operands = 0 : i64, tpu.core_type = #tpu.core_type<tc>, window_params = [{transform_indices = @transform_0, window_bounds = array<i64: 1, 8, 8, 16>}, {transform_indices = @transform_1, window_bounds = array<i64: 1, 8, 16, 16>}, {transform_indices = @transform_2, window_bounds = array<i64: 1, 8, 16, 16>}, {transform_indices = @transform_3, window_bounds = array<i64: 1, 8, 128>}]} {
    %c0 = arith.constant 0 : index
    %c0_0 = arith.constant 0 : index
    %c0_1 = arith.constant 0 : index
    %c0_2 = arith.constant 0 : index
    %0 = vector.load %arg1[%c0, %c0_0, %c0_1, %c0_2] : memref<1x8x8x16xf32, #tpu.memory_space<vmem>>, vector<1x8x8x16xf32>
    %1 = vector.shape_cast %0 : vector<1x8x8x16xf32> to vector<8x8x16xf32>
    %cst = arith.constant 2.500000e-01 : f32
    %2 = vector.broadcast %cst : f32 to vector<8x8x16xf32>
    %3 = arith.mulf %1, %2 : vector<8x8x16xf32>
    %c0_3 = arith.constant 0 : index
    %c0_4 = arith.constant 0 : index
    %c0_5 = arith.constant 0 : index
    %c0_6 = arith.constant 0 : index
    %4 = vector.load %arg2[%c0_3, %c0_4, %c0_5, %c0_6] : memref<1x8x16x16xf32, #tpu.memory_space<vmem>>, vector<1x8x16x16xf32>
    %5 = vector.shape_cast %4 : vector<1x8x16x16xf32> to vector<8x16x16xf32>
    %c0_7 = arith.constant 0 : index
    %c0_8 = arith.constant 0 : index
    %c0_9 = arith.constant 0 : index
    %c0_10 = arith.constant 0 : index
    %6 = vector.load %arg3[%c0_7, %c0_8, %c0_9, %c0_10] : memref<1x8x16x16xf32, #tpu.memory_space<vmem>>, vector<1x8x16x16xf32>
    %7 = vector.shape_cast %6 : vector<1x8x16x16xf32> to vector<8x16x16xf32>
    "tpu.trace_start"() <{level = 10 : i32, message = "hqd,hkd->hqk"}> : () -> ()
    %cst_11 = arith.constant dense<0.000000e+00> : vector<8x8x16xf32>
    %8 = tpu.matmul %3, %5, %cst_11 {dimension_numbers = #tpu.dot_dimension_numbers<[2], [2], [1], [1], [0, 0, 0, 1, 1, 1], [0], [0]>} : vector<8x8x16xf32>, vector<8x16x16xf32>, vector<8x8x16xf32> -> vector<8x8x16xf32>
    "tpu.trace_stop"() : () -> ()
    %cst_12 = arith.constant dense<0xFF800000> : vector<8x8xf32>
    %9 = vector.multi_reduction <maximumf>, %8, %cst_12 [2] : vector<8x8x16xf32> to vector<8x8xf32>
    %10 = vector.shape_cast %9 : vector<8x8xf32> to vector<8x8x1xf32>
    %11 = vector.broadcast %10 : vector<8x8x1xf32> to vector<8x8x16xf32>
    %12 = arith.subf %8, %11 : vector<8x8x16xf32>
    %13 = math.exp %12 : vector<8x8x16xf32>
    %cst_13 = arith.constant dense<0.000000e+00> : vector<8x8xf32>
    %14 = vector.multi_reduction <add>, %13, %cst_13 [2] : vector<8x8x16xf32> to vector<8x8xf32>
    %15 = vector.shape_cast %14 : vector<8x8xf32> to vector<8x8x1xf32>
    %16 = tpu.reciprocal %15 {approx = true} : vector<8x8x1xf32> -> vector<8x8x1xf32>
    %17 = vector.broadcast %16 : vector<8x8x1xf32> to vector<8x8x16xf32>
    %18 = arith.mulf %13, %17 : vector<8x8x16xf32>
    "tpu.trace_start"() <{level = 10 : i32, message = "hqk,hkd->hqd"}> : () -> ()
    %cst_14 = arith.constant dense<0.000000e+00> : vector<8x8x16xf32>
    %19 = tpu.matmul %18, %7, %cst_14 {dimension_numbers = #tpu.dot_dimension_numbers<[2], [1], [1], [2], [0, 0, 0, 1, 1, 2], [0], [0]>} : vector<8x8x16xf32>, vector<8x16x16xf32>, vector<8x8x16xf32> -> vector<8x8x16xf32>
    "tpu.trace_stop"() : () -> ()
    %20 = vector.extract_strided_slice %19 {offsets = [0, 0, 0], sizes = [1, 8, 16], strides = [1, 1, 1]} : vector<8x8x16xf32> to vector<1x8x16xf32>
    %21 = vector.shape_cast %20 : vector<1x8x16xf32> to vector<8x16xf32>
    %c0_15 = arith.constant 0 : index
    %c0_16 = arith.constant 0 : index
    %c0_17 = arith.constant 0 : index
    %22 = vector.load %arg4[%c0_15, %c0_16, %c0_17] : memref<1x8x128xf32, #tpu.memory_space<vmem>>, vector<1x8x16xf32>
    %23 = vector.shape_cast %22 : vector<1x8x16xf32> to vector<8x16xf32>
    %24 = vector.shape_cast %21 : vector<8x16xf32> to vector<1x8x16xf32>
    tpu.vector_store %arg4[%c0_15, %c0_16, %c0_17], %24 {strides = array<i32>} : memref<1x8x128xf32, #tpu.memory_space<vmem>>, vector<1x8x16xf32>,
    %25 = vector.extract_strided_slice %19 {offsets = [1, 0, 0], sizes = [1, 8, 16], strides = [1, 1, 1]} : vector<8x8x16xf32> to vector<1x8x16xf32>
    %26 = vector.shape_cast %25 : vector<1x8x16xf32> to vector<8x16xf32>
    %c0_18 = arith.constant 0 : index
    %c0_19 = arith.constant 0 : index
    %c16 = arith.constant 16 : index
    %27 = vector.load %arg4[%c0_18, %c0_19, %c16] : memref<1x8x128xf32, #tpu.memory_space<vmem>>, vector<1x8x16xf32>
    %28 = vector.shape_cast %27 : vector<1x8x16xf32> to vector<8x16xf32>
    %29 = vector.shape_cast %26 : vector<8x16xf32> to vector<1x8x16xf32>
    tpu.vector_store %arg4[%c0_18, %c0_19, %c16], %29 {strides = array<i32>} : memref<1x8x128xf32, #tpu.memory_space<vmem>>, vector<1x8x16xf32>,
    %30 = vector.extract_strided_slice %19 {offsets = [2, 0, 0], sizes = [1, 8, 16], strides = [1, 1, 1]} : vector<8x8x16xf32> to vector<1x8x16xf32>
    %31 = vector.shape_cast %30 : vector<1x8x16xf32> to vector<8x16xf32>
    %c0_20 = arith.constant 0 : index
    %c0_21 = arith.constant 0 : index
    %c32 = arith.constant 32 : index
    %32 = vector.load %arg4[%c0_20, %c0_21, %c32] : memref<1x8x128xf32, #tpu.memory_space<vmem>>, vector<1x8x16xf32>
    %33 = vector.shape_cast %32 : vector<1x8x16xf32> to vector<8x16xf32>
    %34 = vector.shape_cast %31 : vector<8x16xf32> to vector<1x8x16xf32>
    tpu.vector_store %arg4[%c0_20, %c0_21, %c32], %34 {strides = array<i32>} : memref<1x8x128xf32, #tpu.memory_space<vmem>>, vector<1x8x16xf32>,
    %35 = vector.extract_strided_slice %19 {offsets = [3, 0, 0], sizes = [1, 8, 16], strides = [1, 1, 1]} : vector<8x8x16xf32> to vector<1x8x16xf32>
    %36 = vector.shape_cast %35 : vector<1x8x16xf32> to vector<8x16xf32>
    %c0_22 = arith.constant 0 : index
    %c0_23 = arith.constant 0 : index
    %c48 = arith.constant 48 : index
    %37 = vector.load %arg4[%c0_22, %c0_23, %c48] : memref<1x8x128xf32, #tpu.memory_space<vmem>>, vector<1x8x16xf32>
    %38 = vector.shape_cast %37 : vector<1x8x16xf32> to vector<8x16xf32>
    %39 = vector.shape_cast %36 : vector<8x16xf32> to vector<1x8x16xf32>
    tpu.vector_store %arg4[%c0_22, %c0_23, %c48], %39 {strides = array<i32>} : memref<1x8x128xf32, #tpu.memory_space<vmem>>, vector<1x8x16xf32>,
    %40 = vector.extract_strided_slice %19 {offsets = [4, 0, 0], sizes = [1, 8, 16], strides = [1, 1, 1]} : vector<8x8x16xf32> to vector<1x8x16xf32>
    %41 = vector.shape_cast %40 : vector<1x8x16xf32> to vector<8x16xf32>
    %c0_24 = arith.constant 0 : index
    %c0_25 = arith.constant 0 : index
    %c64 = arith.constant 64 : index
    %42 = vector.load %arg4[%c0_24, %c0_25, %c64] : memref<1x8x128xf32, #tpu.memory_space<vmem>>, vector<1x8x16xf32>
    %43 = vector.shape_cast %42 : vector<1x8x16xf32> to vector<8x16xf32>
    %44 = vector.shape_cast %41 : vector<8x16xf32> to vector<1x8x16xf32>
    tpu.vector_store %arg4[%c0_24, %c0_25, %c64], %44 {strides = array<i32>} : memref<1x8x128xf32, #tpu.memory_space<vmem>>, vector<1x8x16xf32>,
    %45 = vector.extract_strided_slice %19 {offsets = [5, 0, 0], sizes = [1, 8, 16], strides = [1, 1, 1]} : vector<8x8x16xf32> to vector<1x8x16xf32>
    %46 = vector.shape_cast %45 : vector<1x8x16xf32> to vector<8x16xf32>
    %c0_26 = arith.constant 0 : index
    %c0_27 = arith.constant 0 : index
    %c80 = arith.constant 80 : index
    %47 = vector.load %arg4[%c0_26, %c0_27, %c80] : memref<1x8x128xf32, #tpu.memory_space<vmem>>, vector<1x8x16xf32>
    %48 = vector.shape_cast %47 : vector<1x8x16xf32> to vector<8x16xf32>
    %49 = vector.shape_cast %46 : vector<8x16xf32> to vector<1x8x16xf32>
    tpu.vector_store %arg4[%c0_26, %c0_27, %c80], %49 {strides = array<i32>} : memref<1x8x128xf32, #tpu.memory_space<vmem>>, vector<1x8x16xf32>,
    %50 = vector.extract_strided_slice %19 {offsets = [6, 0, 0], sizes = [1, 8, 16], strides = [1, 1, 1]} : vector<8x8x16xf32> to vector<1x8x16xf32>
    %51 = vector.shape_cast %50 : vector<1x8x16xf32> to vector<8x16xf32>
    %c0_28 = arith.constant 0 : index
    %c0_29 = arith.constant 0 : index
    %c96 = arith.constant 96 : index
    %52 = vector.load %arg4[%c0_28, %c0_29, %c96] : memref<1x8x128xf32, #tpu.memory_space<vmem>>, vector<1x8x16xf32>
    %53 = vector.shape_cast %52 : vector<1x8x16xf32> to vector<8x16xf32>
    %54 = vector.shape_cast %51 : vector<8x16xf32> to vector<1x8x16xf32>
    tpu.vector_store %arg4[%c0_28, %c0_29, %c96], %54 {strides = array<i32>} : memref<1x8x128xf32, #tpu.memory_space<vmem>>, vector<1x8x16xf32>,
    %55 = vector.extract_strided_slice %19 {offsets = [7, 0, 0], sizes = [1, 8, 16], strides = [1, 1, 1]} : vector<8x8x16xf32> to vector<1x8x16xf32>
    %56 = vector.shape_cast %55 : vector<1x8x16xf32> to vector<8x16xf32>
    %c0_30 = arith.constant 0 : index
    %c0_31 = arith.constant 0 : index
    %c112 = arith.constant 112 : index
    %57 = vector.load %arg4[%c0_30, %c0_31, %c112] : memref<1x8x128xf32, #tpu.memory_space<vmem>>, vector<1x8x16xf32>
    %58 = vector.shape_cast %57 : vector<1x8x16xf32> to vector<8x16xf32>
    %59 = vector.shape_cast %56 : vector<8x16xf32> to vector<1x8x16xf32>
    tpu.vector_store %arg4[%c0_30, %c0_31, %c112], %59 {strides = array<i32>} : memref<1x8x128xf32, #tpu.memory_space<vmem>>, vector<1x8x16xf32>,
    return
  }
  func.func @transform_0(%arg0: i32) -> (i32, i32, i32, i32) {
    %c0_i32 = arith.constant 0 : i32
    %c0_i32_0 = arith.constant 0 : i32
    %c0_i32_1 = arith.constant 0 : i32
    %c0_i32_2 = arith.constant 0 : i32
    return %arg0, %c0_i32, %c0_i32_0, %c0_i32_1 : i32, i32, i32, i32
  }
  func.func @transform_1(%arg0: i32) -> (i32, i32, i32, i32) {
    %c0_i32 = arith.constant 0 : i32
    %c0_i32_0 = arith.constant 0 : i32
    %c0_i32_1 = arith.constant 0 : i32
    %c0_i32_2 = arith.constant 0 : i32
    return %arg0, %c0_i32, %c0_i32_0, %c0_i32_1 : i32, i32, i32, i32
  }
  func.func @transform_2(%arg0: i32) -> (i32, i32, i32, i32) {
    %c0_i32 = arith.constant 0 : i32
    %c0_i32_0 = arith.constant 0 : i32
    %c0_i32_1 = arith.constant 0 : i32
    %c0_i32_2 = arith.constant 0 : i32
    return %arg0, %c0_i32, %c0_i32_0, %c0_i32_1 : i32, i32, i32, i32
  }
  func.func @transform_3(%arg0: i32) -> (i32, i32, i32) {
    %c0_i32 = arith.constant 0 : i32
    %c0_i32_0 = arith.constant 0 : i32
    %c0_i32_1 = arith.constant 0 : i32
    return %arg0, %c0_i32, %c0_i32_0 : i32, i32, i32
  }
}

</mosaic_0001>

<llo_original>
// kernel: tpu_custom_call.1
$region0: #{tpu_custom_call.1}
  #allocation0 [shape = 'u32[]', space=smem, size = 0x4, offset = 0x4, fixed_abs, tag = 'smem constant byte address 0x4 - core index']
  #allocation1 [shape = 'u32[144,128]{1,0:T(1,128)}', space=vmem, size = 0x12000, scoped, tag = 'internal scratch']
  %s0 = inlined_call_operand.hbm [shape: f32[2,8,8,16], index: 0, kind: input, shape index: {}]
  %s1 = inlined_call_operand.hbm [shape: f32[2,8,16,16], index: 1, kind: input, shape index: {}]
  %s2 = inlined_call_operand.hbm [shape: f32[2,8,16,16], index: 2, kind: input, shape index: {}]
  %s3 = inlined_call_operand.hbm [shape: f32[2,8,128], index: 3, kind: output, shape index: {}]
  %s4 = sld [smem:[#allocation0]]
  $region57: #{tpu_custom_call.1} parent=0
    _
  %s6 = ssub.s32 1, %s4
  %s7 = scalar_select 0, %s6, %s4
  $region1: #{tpu_custom_call.1} parent=0
    #allocation2 [shape = 'u8[65536]{0}', space=vmem, size = 0x10000, scoped, tag = 'input window, operand 0']
    #allocation3 [shape = 's32[2]{0}', space=sflag, size = 0x8, scoped, tag = 'scoped memory for tpu_custom_call.1']
    #allocation4 [shape = 's32[2]{0}', space=sflag, size = 0x8, scoped, tag = 'scoped memory for tpu_custom_call.1']
    #allocation5 [shape = 'u8[131072]{0}', space=vmem, size = 0x20000, scoped, tag = 'input window, operand 1']
    #allocation6 [shape = 's32[2]{0}', space=sflag, size = 0x8, scoped, tag = 'scoped memory for tpu_custom_call.1']
    #allocation7 [shape = 'u8[131072]{0}', space=vmem, size = 0x20000, scoped, tag = 'input window, operand 2']
    #allocation8 [shape = 'u8[8192]{0}', space=vmem, size = 0x2000, scoped, tag = 'output window, operand 0']
    %8 = vsyncpa [#allocation3], 0
    %s9 = scalar_lea.sflag [#allocation3], 1
    %10 = vsyncpa %s9, 0
    %11 = vsyncpa [#allocation6], 0
    %s12 = scalar_lea.sflag [#allocation6], 1
    %13 = vsyncpa %s12, 0
    %14 = vsyncpa [#allocation4], 0
    %s15 = scalar_lea.sflag [#allocation4], 1
    %16 = vsyncpa %s15, 0
    loop: start=0, step=1, limit=4
    $region2: #{tpu_custom_call.1} parent=1 // loop_pre_header
      _
    $region3: #{tpu_custom_call.1} parent=1 // loop_header
      %s18 = sphi 0, %s22
      %p19 = scmp.ge.s32.totalorder %s18, 4
      %s28 = sphi 0, %s30
      %s31 = sphi 0, %s28
      %s32 = sphi 0, %s31
      %s48 = sphi 0, %s32
      %s54 = sphi 0, %s56
      %s57 = sphi 0, %s54
      %s58 = sphi 0, %s57
      %s74 = sphi 0, %s58
      %s80 = sphi 0, %s82
      %s83 = sphi 0, %s80
      %s84 = sphi 0, %s83
      %s100 = sphi 0, %s84
      %s106 = sphi 0, %s108
      %s109 = sphi 0, %s106
      %s110 = sphi 0, %s109
      %s126 = sphi 0, %s110
    $region4: #{tpu_custom_call.1} parent=1 // loop_header_branch
      %21 = sbr.rel (%p19) target = $region8
    $region5: #{tpu_custom_call.1} parent=1 // loop_body
      %s23 = ssub.s32 %s18, 1
      %s24 = ssub.s32 %s18, 2
      %s25 = sadd.s32 %s18, 1
      %s26 = ssub.s32 %s18, %s25
      %p27 = scmp.eq.s32.totalorder %s26, 0
      %s29 = sadd.s32 %s28, 1
      %s30 = scalar_select %p27, %s28, %s29
      %p33 = pneg %p27
      %p34 = scmp.eq.s32.totalorder %s18, 1
      %p35 = por %p33, %p34
      %p36 = scmp.ne.s32.totalorder %s28, %s31
      %p37 = scmp.eq.s32.totalorder %s18, 0
      %p38 = por %p36, %p37
      %p39 = scmp.ne.s32.totalorder %s28, %s31
      %p40 = scmp.eq.s32.totalorder %s23, 1
      %p41 = por %p39, %p40
      %p42 = scmp.ne.s32.totalorder %s31, %s32
      %p43 = scmp.eq.s32.totalorder %s23, 0
      %p44 = por %p42, %p43
      %p45 = scmp.ne.s32.totalorder %s31, %s32
      %p46 = scmp.eq.s32.totalorder %s24, 1
      %p47 = por %p45, %p46
      %p49 = scmp.ne.s32.totalorder %s32, %s48
      %p50 = scmp.eq.s32.totalorder %s24, 0
      %p51 = por %p49, %p50
      %s52 = ssub.s32 %s18, %s25
      %p53 = scmp.eq.s32.totalorder %s52, 0
      %s55 = sadd.s32 %s54, 1
      %s56 = scalar_select %p53, %s54, %s55
      %p59 = pneg %p53
      %p60 = scmp.eq.s32.totalorder %s18, 1
      %p61 = por %p59, %p60
      %p62 = scmp.ne.s32.totalorder %s54, %s57
      %p63 = scmp.eq.s32.totalorder %s18, 0
      %p64 = por %p62, %p63
      %p65 = scmp.ne.s32.totalorder %s54, %s57
      %p66 = scmp.eq.s32.totalorder %s23, 1
      %p67 = por %p65, %p66
      %p68 = scmp.ne.s32.totalorder %s57, %s58
      %p69 = scmp.eq.s32.totalorder %s23, 0
      %p70 = por %p68, %p69
      %p71 = scmp.ne.s32.totalorder %s57, %s58
      %p72 = scmp.eq.s32.totalorder %s24, 1
      %p73 = por %p71, %p72
      %p75 = scmp.ne.s32.totalorder %s58, %s74
      %p76 = scmp.eq.s32.totalorder %s24, 0
      %p77 = por %p75, %p76
      %s78 = ssub.s32 %s18, %s25
      %p79 = scmp.eq.s32.totalorder %s78, 0
      %s81 = sadd.s32 %s80, 1
      %s82 = scalar_select %p79, %s80, %s81
      %p85 = pneg %p79
      %p86 = scmp.eq.s32.totalorder %s18, 1
      %p87 = por %p85, %p86
      %p88 = scmp.ne.s32.totalorder %s80, %s83
      %p89 = scmp.eq.s32.totalorder %s18, 0
      %p90 = por %p88, %p89
      %p91 = scmp.ne.s32.totalorder %s80, %s83
      %p92 = scmp.eq.s32.totalorder %s23, 1
      %p93 = por %p91, %p92
      %p94 = scmp.ne.s32.totalorder %s83, %s84
      %p95 = scmp.eq.s32.totalorder %s23, 0
      %p96 = por %p94, %p95
      %p97 = scmp.ne.s32.totalorder %s83, %s84
      %p98 = scmp.eq.s32.totalorder %s24, 1
      %p99 = por %p97, %p98
      %p101 = scmp.ne.s32.totalorder %s84, %s100
      %p102 = scmp.eq.s32.totalorder %s24, 0
      %p103 = por %p101, %p102
      %s104 = ssub.s32 %s18, %s25
      %p105 = scmp.eq.s32.totalorder %s104, 0
      %s107 = sadd.s32 %s106, 1
      %s108 = scalar_select %p105, %s106, %s107
      %p111 = pneg %p105
      %p112 = scmp.eq.s32.totalorder %s18, 1
      %p113 = por %p111, %p112
      %p114 = scmp.ne.s32.totalorder %s106, %s109
      %p115 = scmp.eq.s32.totalorder %s18, 0
      %p116 = por %p114, %p115
      %p117 = scmp.ne.s32.totalorder %s106, %s109
      %p118 = scmp.eq.s32.totalorder %s23, 1
      %p119 = por %p117, %p118
      %p120 = scmp.ne.s32.totalorder %s109, %s110
      %p121 = scmp.eq.s32.totalorder %s23, 0
      %p122 = por %p120, %p121
      %p123 = scmp.ne.s32.totalorder %s109, %s110
      %p124 = scmp.eq.s32.totalorder %s24, 1
      %p125 = por %p123, %p124
      %p127 = scmp.ne.s32.totalorder %s110, %s126
      %p128 = scmp.eq.s32.totalorder %s24, 0
      %p129 = por %p127, %p128
      %p130 = scmp.le.s32.totalorder 1, %s18
      %p131 = scmp.lt.s32.totalorder %s18, 3
      %p132 = pnand %p130, %p131
      %p133 = pneg %p132
      // Predicated region
      $region9: #{tpu_custom_call.1} parent=5 // pred_check
        _
      $region10: #{tpu_custom_call.1} parent=5 // pred_check_branch
        %135 = sbr.rel (%p132) target = $region12
      $region11: #{tpu_custom_call.1} parent=5 // pred_region
        %s136 = ssub.s32 %s18, 1
      $region12: #{tpu_custom_call.1} parent=5 // pred_fallthru
        _
      %p137 = scmp.lt.s32.totalorder %s18, 2
      // Predicated region
      $region13: #{tpu_custom_call.1} parent=5 // pred_check
        %p138 = pneg %p137
      $region14: #{tpu_custom_call.1} parent=5 // pred_check_branch
        %140 = sbr.rel (%p138) target = $region16
      $region15: #{tpu_custom_call.1} parent=5 // pred_region
        // Predicated region
        $region17: #{tpu_custom_call.1} parent=15 // pred_check
          %p141 = pneg %p38
        $region18: #{tpu_custom_call.1} parent=15 // pred_check_branch
          %143 = sbr.rel (%p141) target = $region20
        $region19: #{tpu_custom_call.1} parent=15 // pred_region
          %s144 = sand.u32 %s28, 1
          %s145 = scalar_lea.sflag [#allocation3], %s144
          %s146 = sand.u32 %s28, 1
          %s147 = smul.addr %s146, 64
          %s148 = scalar_lea.vmem [#allocation2], %s147
          %s150 = ssub.s32 1024, 1024
          %151 = vsyncadd %s145, %s150
          %s152 = smul.addr %s18, 8
          %s153 = smul.addr %s152, 128
          %s154 = scalar_lea.hbm %s0, %s153
          %s155 = sshll.u32 %s148, 4
          %s156 = int_to_ptr.vmem [resolvable:$true] %s155
          %161 = dma.hbm_to_vmem [thread:$0]  %s154, 1024, %s156, %s145, 128, 128, 8
        $region20: #{tpu_custom_call.1} parent=15 // pred_fallthru
          _
        // Predicated region
        $region21: #{tpu_custom_call.1} parent=15 // pred_check
          %p162 = pneg %p64
        $region22: #{tpu_custom_call.1} parent=15 // pred_check_branch
          %164 = sbr.rel (%p162) target = $region24
        $region23: #{tpu_custom_call.1} parent=15 // pred_region
          %s165 = sand.u32 %s18, 1
          %s166 = scalar_lea.sflag [#allocation6], %s165
          %s167 = sand.u32 %s54, 1
          %s168 = smul.addr %s167, 128
          %s169 = scalar_lea.vmem [#allocation5], %s168
          %s171 = ssub.s32 2048, 2048
          %172 = vsyncadd %s166, %s171
          %s173 = smul.addr %s18, 16
          %s174 = smul.addr %s173, 128
          %s175 = scalar_lea.hbm %s1, %s174
          %s176 = sshll.u32 %s169, 4
          %s177 = int_to_ptr.vmem [resolvable:$true] %s176
          %182 = dma.hbm_to_vmem [thread:$0]  %s175, 2048, %s177, %s166, 128, 128, 8
        $region24: #{tpu_custom_call.1} parent=15 // pred_fallthru
          _
        // Predicated region
        $region25: #{tpu_custom_call.1} parent=15 // pred_check
          %p183 = pneg %p90
        $region26: #{tpu_custom_call.1} parent=15 // pred_check_branch
          %185 = sbr.rel (%p183) target = $region28
        $region27: #{tpu_custom_call.1} parent=15 // pred_region
          %s186 = sand.u32 %s18, 1
          %s187 = scalar_lea.sflag [#allocation6], %s186
          %s188 = sand.u32 %s80, 1
          %s189 = smul.addr %s188, 128
          %s190 = scalar_lea.vmem [#allocation7], %s189
          %s192 = ssub.s32 2048, 2048
          %193 = vsyncadd %s187, %s192
          %s194 = smul.addr %s18, 16
          %s195 = smul.addr %s194, 128
          %s196 = scalar_lea.hbm %s2, %s195
          %s197 = sshll.u32 %s190, 4
          %s198 = int_to_ptr.vmem [resolvable:$true] %s197
          %203 = dma.hbm_to_vmem [thread:$0]  %s196, 2048, %s198, %s187, 128, 128, 8
        $region28: #{tpu_custom_call.1} parent=15 // pred_fallthru
          _
      $region16: #{tpu_custom_call.1} parent=5 // pred_fallthru
        _
      %p204 = scmp.le.s32.totalorder 1, %s18
      %p205 = scmp.lt.s32.totalorder %s18, 3
      %p206 = pnand %p204, %p205
      %p207 = pneg %p206
      // Predicated region
      $region29: #{tpu_custom_call.1} parent=5 // pred_check
        _
      $region30: #{tpu_custom_call.1} parent=5 // pred_check_branch
        %209 = sbr.rel (%p206) target = $region32
      $region31: #{tpu_custom_call.1} parent=5 // pred_region
        %s210 = ssub.s32 %s18, 1
        %s211 = sand.u32 %s31, 1
        %s212 = scalar_lea.sflag [#allocation3], %s211
        %s213 = sand.u32 %s31, 1
        %s214 = smul.addr %s213, 64
        %s215 = scalar_lea.vmem [#allocation2], %s214
        // Predicated region
        $region33: #{tpu_custom_call.1} parent=31 // pred_check
          %p216 = pneg %p44
        $region34: #{tpu_custom_call.1} parent=31 // pred_check_branch
          %218 = sbr.rel (%p216) target = $region36
        $region35: #{tpu_custom_call.1} parent=31 // pred_region
          %219 = dma.done %s212, 1024
        $region36: #{tpu_custom_call.1} parent=31 // pred_fallthru
          _
        %s220 = sand.u32 %s23, 1
        %s221 = scalar_lea.sflag [#allocation6], %s220
        %s222 = sand.u32 %s57, 1
        %s223 = smul.addr %s222, 128
        %s224 = scalar_lea.vmem [#allocation5], %s223
        // Predicated region
        $region37: #{tpu_custom_call.1} parent=31 // pred_check
          %p225 = pneg %p70
        $region38: #{tpu_custom_call.1} parent=31 // pred_check_branch
          %227 = sbr.rel (%p225) target = $region40
        $region39: #{tpu_custom_call.1} parent=31 // pred_region
          %228 = dma.done %s221, 2048
        $region40: #{tpu_custom_call.1} parent=31 // pred_fallthru
          _
        %s229 = sand.u32 %s23, 1
        %s230 = scalar_lea.sflag [#allocation6], %s229
        %s231 = sand.u32 %s83, 1
        %s232 = smul.addr %s231, 128
        %s233 = scalar_lea.vmem [#allocation7], %s232
        // Predicated region
        $region41: #{tpu_custom_call.1} parent=31 // pred_check
          %p234 = pneg %p96
        $region42: #{tpu_custom_call.1} parent=31 // pred_check_branch
          %236 = sbr.rel (%p234) target = $region44
        $region43: #{tpu_custom_call.1} parent=31 // pred_region
          %237 = dma.done %s230, 2048
        $region44: #{tpu_custom_call.1} parent=31 // pred_fallthru
          _
        %s238 = sand.u32 %s31, 1
        %s239 = scalar_lea.sflag [#allocation3], %s238
        %s240 = sand.u32 %s31, 1
        %s241 = smul.addr %s240, 64
        %s242 = scalar_lea.vmem [#allocation2], %s241
        %p243 = pneg %p44
        %p244 = pneg %p41
        %s245 = sand.u32 %s23, 1
        %s246 = scalar_lea.sflag [#allocation6], %s245
        %s247 = sand.u32 %s57, 1
        %s248 = smul.addr %s247, 128
        %s249 = scalar_lea.vmem [#allocation5], %s248
        %p250 = pneg %p70
        %p251 = pneg %p67
        %s252 = sand.u32 %s23, 1
        %s253 = scalar_lea.sflag [#allocation6], %s252
        %s254 = sand.u32 %s83, 1
        %s255 = smul.addr %s254, 128
        %s256 = scalar_lea.vmem [#allocation7], %s255
        %p257 = pneg %p96
        %p258 = pneg %p93
        %p259 = pneg %p122
        %p260 = pneg %p119
        %s261 = sand.u32 %s109, 1
        %s262 = scalar_lea.sflag [#allocation4], %s261
        %s263 = sand.u32 %s109, 1
        %s264 = smul.addr %s263, 8
        %s265 = scalar_lea.vmem [#allocation8], %s264
        %v266 = vld [vmem:[%s215] sm:$0xff]
        %v267 = vld [vmem:[%s215 + $0x8] sm:$0xff]
        %v268 = vld [vmem:[%s215 + $0x10] sm:$0xff]
        %v269 = vld [vmem:[%s215 + $0x18] sm:$0xff]
        %v270 = vld [vmem:[%s215 + $0x20] sm:$0xff]
        %v271 = vld [vmem:[%s215 + $0x28] sm:$0xff]
        %v272 = vld [vmem:[%s215 + $0x30] sm:$0xff]
        %v273 = vld [vmem:[%s215 + $0x38] sm:$0xff]
        %v274 = vmul.f32 %v266, 0.25
        %v275 = vmul.f32 %v267, 0.25
        %v276 = vmul.f32 %v268, 0.25
        %v277 = vmul.f32 %v269, 0.25
        %v278 = vmul.f32 %v270, 0.25
        %v279 = vmul.f32 %v271, 0.25
        %v280 = vmul.f32 %v272, 0.25
        %v281 = vmul.f32 %v273, 0.25
        %v282 = vld [vmem:[%s224] sm:$0xff]
        %v283 = vld [vmem:[%s224 + $0x8] sm:$0xff]
        %v284 = vld [vmem:[%s224 + $0x10] sm:$0xff]
        %v285 = vld [vmem:[%s224 + $0x18] sm:$0xff]
        %v286 = vld [vmem:[%s224 + $0x20] sm:$0xff]
        %v287 = vld [vmem:[%s224 + $0x28] sm:$0xff]
        %v288 = vld [vmem:[%s224 + $0x30] sm:$0xff]
        %v289 = vld [vmem:[%s224 + $0x38] sm:$0xff]
        %v290 = vld [vmem:[%s224 + $0x40] sm:$0xff]
        %v291 = vld [vmem:[%s224 + $0x48] sm:$0xff]
        %v292 = vld [vmem:[%s224 + $0x50] sm:$0xff]
        %v293 = vld [vmem:[%s224 + $0x58] sm:$0xff]
        %v294 = vld [vmem:[%s224 + $0x60] sm:$0xff]
        %v295 = vld [vmem:[%s224 + $0x68] sm:$0xff]
        %v296 = vld [vmem:[%s224 + $0x70] sm:$0xff]
        %v297 = vld [vmem:[%s224 + $0x78] sm:$0xff]
        %v298 = vld [vmem:[%s233] sm:$0xff]
        %v299 = vld [vmem:[%s233 + $0x8] sm:$0xff]
        %v300 = vld [vmem:[%s233 + $0x10] sm:$0xff]
        %v301 = vld [vmem:[%s233 + $0x18] sm:$0xff]
        %v302 = vld [vmem:[%s233 + $0x20] sm:$0xff]
        %v303 = vld [vmem:[%s233 + $0x28] sm:$0xff]
        %v304 = vld [vmem:[%s233 + $0x30] sm:$0xff]
        %v305 = vld [vmem:[%s233 + $0x38] sm:$0xff]
        %v306 = vld [vmem:[%s233 + $0x40] sm:$0xff]
        %v307 = vld [vmem:[%s233 + $0x48] sm:$0xff]
        %v308 = vld [vmem:[%s233 + $0x50] sm:$0xff]
        %v309 = vld [vmem:[%s233 + $0x58] sm:$0xff]
        %v310 = vld [vmem:[%s233 + $0x60] sm:$0xff]
        %v311 = vld [vmem:[%s233 + $0x68] sm:$0xff]
        %v312 = vld [vmem:[%s233 + $0x70] sm:$0xff]
        %v313 = vld [vmem:[%s233 + $0x78] sm:$0xff]
        %vm314 = vcmask 130048
        %v316 = vsel %vm314, %v274, 0
        %v319 = vsel %vm314, %v282, 0
        %v322 = vsel %vm314, %v283, 0
        %324 = vmatprep.subr.mxu0 0.0
        %325 = vmatpush1.xpose.msra.mxu0 %v319
        %326 = vmatprep.subr.mxu0 0.0
        %327 = vmatpush1.xpose.msra.mxu0 %v322
        %328 = vmatprep.subr.mxu0 0.0
        %329 = vmatpush1.xpose.msra.mxu0 0.0
        %330 = vmatprep.subr.mxu0 0.0
        %331 = vmatpush1.xpose.msra.mxu0 0.0
        %332 = vmatprep.subr.mxu0 0.0
        %333 = vmatpush1.xpose.msra.mxu0 0.0
        %334 = vmatprep.subr.mxu0 0.0
        %335 = vmatpush1.xpose.msra.mxu0 0.0
        %336 = vmatprep.subr.mxu0 0.0
        %337 = vmatpush1.xpose.msra.mxu0 0.0
        %338 = vmatprep.subr.mxu0 0.0
        %339 = vmatpush1.xpose.msra.mxu0 0.0
        %340 = vmatprep.subr.mxu0 0.0
        %341 = vmatpush1.xpose.msra.mxu0 0.0
        %342 = vmatprep.subr.mxu0 0.0
        %343 = vmatpush1.xpose.msra.mxu0 0.0
        %344 = vmatprep.subr.mxu0 0.0
        %345 = vmatpush1.xpose.msra.mxu0 0.0
        %346 = vmatprep.subr.mxu0 0.0
        %347 = vmatpush1.xpose.msra.mxu0 0.0
        %348 = vmatprep.subr.mxu0 0.0
        %349 = vmatpush1.xpose.msra.mxu0 0.0
        %350 = vmatprep.subr.mxu0 0.0
        %351 = vmatpush1.xpose.msra.mxu0 0.0
        %352 = vmatprep.subr.mxu0 0.0
        %353 = vmatpush1.xpose.msra.mxu0 0.0
        %354 = vmatprep.subr.mxu0 0.0
        %355 = vmatpush1.xpose.msra.mxu0 0.0
        %356 = vmatprep.subr.mxu0 0.0
        %357 = vmatpush1.xpose.msra.mxu0 0.0
        %358 = vmatprep.subr.mxu0 0.0
        %359 = vmatpush1.xpose.msra.mxu0 0.0
        %360 = vmatprep.subr.mxu0 0.0
        %361 = vmatpush1.xpose.msra.mxu0 0.0
        %362 = vmatprep.subr.mxu0 0.0
        %363 = vmatpush1.xpose.msra.mxu0 0.0
        %364 = vmatprep.subr.mxu0 0.0
        %365 = vmatpush1.xpose.msra.mxu0 0.0
        %366 = vmatprep.subr.mxu0 0.0
        %367 = vmatpush1.xpose.msra.mxu0 0.0
        %368 = vmatprep.subr.mxu0 0.0
        %369 = vmatpush1.xpose.msra.mxu0 0.0
        %370 = vmatprep.subr.mxu0 0.0
        %371 = vmatpush1.xpose.msra.mxu0 0.0
        %372 = vmatprep.subr.mxu0 0.0
        %373 = vmatpush1.xpose.msra.mxu0 0.0
        %374 = vmatprep.subr.mxu0 0.0
        %375 = vmatpush1.xpose.msra.mxu0 0.0
        %376 = vmatprep.subr.mxu0 0.0
        %377 = vmatpush1.xpose.msra.mxu0 0.0
        %378 = vmatprep.subr.mxu0 0.0
        %379 = vmatpush1.xpose.msra.mxu0 0.0
        %380 = vmatprep.subr.mxu0 0.0
        %381 = vmatpush1.xpose.msra.mxu0 0.0
        %382 = vmatprep.subr.mxu0 0.0
        %383 = vmatpush1.xpose.msra.mxu0 0.0
        %384 = vmatprep.subr.mxu0 0.0
        %385 = vmatpush1.xpose.msra.mxu0 0.0
        %386 = vmatprep.subr.mxu0 0.0
        %387 = vmatpush1.xpose.msra.mxu0 0.0
        %388 = vmatprep.mubr.f32.mxu0 0.0
        %389 = vmatmul.mubr.f32.gmra.mrb[0].mxu0 %v316
        %v390 = vpop.f32.mrb[0].mxu0
        %v391 = vadd.f32 0.0, %v390
        %v392 = vpop.f32.mrb[0].mxu0
        %393 = vdwg.mxu0
        %v395 = vsel %vm314, %v275, 0
        %v398 = vsel %vm314, %v284, 0
        %v401 = vsel %vm314, %v285, 0
        %403 = vmatprep.subr.mxu0 0.0
        %404 = vmatpush1.xpose.msra.mxu0 %v398
        %405 = vmatprep.subr.mxu0 0.0
        %406 = vmatpush1.xpose.msra.mxu0 %v401
        %407 = vmatprep.subr.mxu0 0.0
        %408 = vmatpush1.xpose.msra.mxu0 0.0
        %409 = vmatprep.subr.mxu0 0.0
        %410 = vmatpush1.xpose.msra.mxu0 0.0
        %411 = vmatprep.subr.mxu0 0.0
        %412 = vmatpush1.xpose.msra.mxu0 0.0
        %413 = vmatprep.subr.mxu0 0.0
        %414 = vmatpush1.xpose.msra.mxu0 0.0
        %415 = vmatprep.subr.mxu0 0.0
        %416 = vmatpush1.xpose.msra.mxu0 0.0
        %417 = vmatprep.subr.mxu0 0.0
        %418 = vmatpush1.xpose.msra.mxu0 0.0
        %419 = vmatprep.subr.mxu0 0.0
        %420 = vmatpush1.xpose.msra.mxu0 0.0
        %421 = vmatprep.subr.mxu0 0.0
        %422 = vmatpush1.xpose.msra.mxu0 0.0
        %423 = vmatprep.subr.mxu0 0.0
        %424 = vmatpush1.xpose.msra.mxu0 0.0
        %425 = vmatprep.subr.mxu0 0.0
        %426 = vmatpush1.xpose.msra.mxu0 0.0
        %427 = vmatprep.subr.mxu0 0.0
        %428 = vmatpush1.xpose.msra.mxu0 0.0
        %429 = vmatprep.subr.mxu0 0.0
        %430 = vmatpush1.xpose.msra.mxu0 0.0
        %431 = vmatprep.subr.mxu0 0.0
        %432 = vmatpush1.xpose.msra.mxu0 0.0
        %433 = vmatprep.subr.mxu0 0.0
        %434 = vmatpush1.xpose.msra.mxu0 0.0
        %435 = vmatprep.subr.mxu0 0.0
        %436 = vmatpush1.xpose.msra.mxu0 0.0
        %437 = vmatprep.subr.mxu0 0.0
        %438 = vmatpush1.xpose.msra.mxu0 0.0
        %439 = vmatprep.subr.mxu0 0.0
        %440 = vmatpush1.xpose.msra.mxu0 0.0
        %441 = vmatprep.subr.mxu0 0.0
        %442 = vmatpush1.xpose.msra.mxu0 0.0
        %443 = vmatprep.subr.mxu0 0.0
        %444 = vmatpush1.xpose.msra.mxu0 0.0
        %445 = vmatprep.subr.mxu0 0.0
        %446 = vmatpush1.xpose.msra.mxu0 0.0
        %447 = vmatprep.subr.mxu0 0.0
        %448 = vmatpush1.xpose.msra.mxu0 0.0
        %449 = vmatprep.subr.mxu0 0.0
        %450 = vmatpush1.xpose.msra.mxu0 0.0
        %451 = vmatprep.subr.mxu0 0.0
        %452 = vmatpush1.xpose.msra.mxu0 0.0
        %453 = vmatprep.subr.mxu0 0.0
        %454 = vmatpush1.xpose.msra.mxu0 0.0
        %455 = vmatprep.subr.mxu0 0.0
        %456 = vmatpush1.xpose.msra.mxu0 0.0
        %457 = vmatprep.subr.mxu0 0.0
        %458 = vmatpush1.xpose.msra.mxu0 0.0
        %459 = vmatprep.subr.mxu0 0.0
        %460 = vmatpush1.xpose.msra.mxu0 0.0
        %461 = vmatprep.subr.mxu0 0.0
        %462 = vmatpush1.xpose.msra.mxu0 0.0
        %463 = vmatprep.subr.mxu0 0.0
        %464 = vmatpush1.xpose.msra.mxu0 0.0
        %465 = vmatprep.subr.mxu0 0.0
        %466 = vmatpush1.xpose.msra.mxu0 0.0
        %467 = vmatprep.mubr.f32.mxu0 0.0
        %468 = vmatmul.mubr.f32.gmra.mrb[0].mxu0 %v395
        %v469 = vpop.f32.mrb[0].mxu0
        %v470 = vadd.f32 0.0, %v469
        %v471 = vpop.f32.mrb[0].mxu0
        %472 = vdwg.mxu0
        %v474 = vsel %vm314, %v276, 0
        %v477 = vsel %vm314, %v286, 0
        %v480 = vsel %vm314, %v287, 0
        %482 = vmatprep.subr.mxu0 0.0
        %483 = vmatpush1.xpose.msra.mxu0 %v477
        %484 = vmatprep.subr.mxu0 0.0
        %485 = vmatpush1.xpose.msra.mxu0 %v480
        %486 = vmatprep.subr.mxu0 0.0
        %487 = vmatpush1.xpose.msra.mxu0 0.0
        %488 = vmatprep.subr.mxu0 0.0
        %489 = vmatpush1.xpose.msra.mxu0 0.0
        %490 = vmatprep.subr.mxu0 0.0
        %491 = vmatpush1.xpose.msra.mxu0 0.0
        %492 = vmatprep.subr.mxu0 0.0
        %493 = vmatpush1.xpose.msra.mxu0 0.0
        %494 = vmatprep.subr.mxu0 0.0
        %495 = vmatpush1.xpose.msra.mxu0 0.0
        %496 = vmatprep.subr.mxu0 0.0
        %497 = vmatpush1.xpose.msra.mxu0 0.0
        %498 = vmatprep.subr.mxu0 0.0
        %499 = vmatpush1.xpose.msra.mxu0 0.0
        %500 = vmatprep.subr.mxu0 0.0
        %501 = vmatpush1.xpose.msra.mxu0 0.0
        %502 = vmatprep.subr.mxu0 0.0
        %503 = vmatpush1.xpose.msra.mxu0 0.0
        %504 = vmatprep.subr.mxu0 0.0
        %505 = vmatpush1.xpose.msra.mxu0 0.0
        %506 = vmatprep.subr.mxu0 0.0
        %507 = vmatpush1.xpose.msra.mxu0 0.0
        %508 = vmatprep.subr.mxu0 0.0
        %509 = vmatpush1.xpose.msra.mxu0 0.0
        %510 = vmatprep.subr.mxu0 0.0
        %511 = vmatpush1.xpose.msra.mxu0 0.0
        %512 = vmatprep.subr.mxu0 0.0
        %513 = vmatpush1.xpose.msra.mxu0 0.0
        %514 = vmatprep.subr.mxu0 0.0
        %515 = vmatpush1.xpose.msra.mxu0 0.0
        %516 = vmatprep.subr.mxu0 0.0
        %517 = vmatpush1.xpose.msra.mxu0 0.0
        %518 = vmatprep.subr.mxu0 0.0
        %519 = vmatpush1.xpose.msra.mxu0 0.0
        %520 = vmatprep.subr.mxu0 0.0
        %521 = vmatpush1.xpose.msra.mxu0 0.0
        %522 = vmatprep.subr.mxu0 0.0
        %523 = vmatpush1.xpose.msra.mxu0 0.0
        %524 = vmatprep.subr.mxu0 0.0
        %525 = vmatpush1.xpose.msra.mxu0 0.0
        %526 = vmatprep.subr.mxu0 0.0
        %527 = vmatpush1.xpose.msra.mxu0 0.0
        %528 = vmatprep.subr.mxu0 0.0
        %529 = vmatpush1.xpose.msra.mxu0 0.0
        %530 = vmatprep.subr.mxu0 0.0
        %531 = vmatpush1.xpose.msra.mxu0 0.0
        %532 = vmatprep.subr.mxu0 0.0
        %533 = vmatpush1.xpose.msra.mxu0 0.0
        %534 = vmatprep.subr.mxu0 0.0
        %535 = vmatpush1.xpose.msra.mxu0 0.0
        %536 = vmatprep.subr.mxu0 0.0
        %537 = vmatpush1.xpose.msra.mxu0 0.0
        %538 = vmatprep.subr.mxu0 0.0
        %539 = vmatpush1.xpose.msra.mxu0 0.0
        %540 = vmatprep.subr.mxu0 0.0
        %541 = vmatpush1.xpose.msra.mxu0 0.0
        %542 = vmatprep.subr.mxu0 0.0
        %543 = vmatpush1.xpose.msra.mxu0 0.0
        %544 = vmatprep.subr.mxu0 0.0
        %545 = vmatpush1.xpose.msra.mxu0 0.0
        %546 = vmatprep.mubr.f32.mxu0 0.0
        %547 = vmatmul.mubr.f32.gmra.mrb[0].mxu0 %v474
        %v548 = vpop.f32.mrb[0].mxu0
        %v549 = vadd.f32 0.0, %v548
        %v550 = vpop.f32.mrb[0].mxu0
        %551 = vdwg.mxu0
        %v553 = vsel %vm314, %v277, 0
        %v556 = vsel %vm314, %v288, 0
        %v559 = vsel %vm314, %v289, 0
        %561 = vmatprep.subr.mxu0 0.0
        %562 = vmatpush1.xpose.msra.mxu0 %v556
        %563 = vmatprep.subr.mxu0 0.0
        %564 = vmatpush1.xpose.msra.mxu0 %v559
        %565 = vmatprep.subr.mxu0 0.0
        %566 = vmatpush1.xpose.msra.mxu0 0.0
        %567 = vmatprep.subr.mxu0 0.0
        %568 = vmatpush1.xpose.msra.mxu0 0.0
        %569 = vmatprep.subr.mxu0 0.0
        %570 = vmatpush1.xpose.msra.mxu0 0.0
        %571 = vmatprep.subr.mxu0 0.0
        %572 = vmatpush1.xpose.msra.mxu0 0.0
        %573 = vmatprep.subr.mxu0 0.0
        %574 = vmatpush1.xpose.msra.mxu0 0.0
        %575 = vmatprep.subr.mxu0 0.0
        %576 = vmatpush1.xpose.msra.mxu0 0.0
        %577 = vmatprep.subr.mxu0 0.0
        %578 = vmatpush1.xpose.msra.mxu0 0.0
        %579 = vmatprep.subr.mxu0 0.0
        %580 = vmatpush1.xpose.msra.mxu0 0.0
        %581 = vmatprep.subr.mxu0 0.0
        %582 = vmatpush1.xpose.msra.mxu0 0.0
        %583 = vmatprep.subr.mxu0 0.0
        %584 = vmatpush1.xpose.msra.mxu0 0.0
        %585 = vmatprep.subr.mxu0 0.0
        %586 = vmatpush1.xpose.msra.mxu0 0.0
        %587 = vmatprep.subr.mxu0 0.0
        %588 = vmatpush1.xpose.msra.mxu0 0.0
        %589 = vmatprep.subr.mxu0 0.0
        %590 = vmatpush1.xpose.msra.mxu0 0.0
        %591 = vmatprep.subr.mxu0 0.0
        %592 = vmatpush1.xpose.msra.mxu0 0.0
        %593 = vmatprep.subr.mxu0 0.0
        %594 = vmatpush1.xpose.msra.mxu0 0.0
        %595 = vmatprep.subr.mxu0 0.0
        %596 = vmatpush1.xpose.msra.mxu0 0.0
        %597 = vmatprep.subr.mxu0 0.0
        %598 = vmatpush1.xpose.msra.mxu0 0.0
        %599 = vmatprep.subr.mxu0 0.0
        %600 = vmatpush1.xpose.msra.mxu0 0.0
        %601 = vmatprep.subr.mxu0 0.0
        %602 = vmatpush1.xpose.msra.mxu0 0.0
        %603 = vmatprep.subr.mxu0 0.0
        %604 = vmatpush1.xpose.msra.mxu0 0.0
        %605 = vmatprep.subr.mxu0 0.0
        %606 = vmatpush1.xpose.msra.mxu0 0.0
        %607 = vmatprep.subr.mxu0 0.0
        %608 = vmatpush1.xpose.msra.mxu0 0.0
        %609 = vmatprep.subr.mxu0 0.0
        %610 = vmatpush1.xpose.msra.mxu0 0.0
        %611 = vmatprep.subr.mxu0 0.0
        %612 = vmatpush1.xpose.msra.mxu0 0.0
        %613 = vmatprep.subr.mxu0 0.0
        %614 = vmatpush1.xpose.msra.mxu0 0.0
        %615 = vmatprep.subr.mxu0 0.0
        %616 = vmatpush1.xpose.msra.mxu0 0.0
        %617 = vmatprep.subr.mxu0 0.0
        %618 = vmatpush1.xpose.msra.mxu0 0.0
        %619 = vmatprep.subr.mxu0 0.0
        %620 = vmatpush1.xpose.msra.mxu0 0.0
        %621 = vmatprep.subr.mxu0 0.0
        %622 = vmatpush1.xpose.msra.mxu0 0.0
        %623 = vmatprep.subr.mxu0 0.0
        %624 = vmatpush1.xpose.msra.mxu0 0.0
        %625 = vmatprep.mubr.f32.mxu0 0.0
        %626 = vmatmul.mubr.f32.gmra.mrb[0].mxu0 %v553
        %v627 = vpop.f32.mrb[0].mxu0
        %v628 = vadd.f32 0.0, %v627
        %v629 = vpop.f32.mrb[0].mxu0
        %630 = vdwg.mxu0
        %v632 = vsel %vm314, %v278, 0
        %v635 = vsel %vm314, %v290, 0
        %v638 = vsel %vm314, %v291, 0
        %640 = vmatprep.subr.mxu0 0.0
        %641 = vmatpush1.xpose.msra.mxu0 %v635
        %642 = vmatprep.subr.mxu0 0.0
        %643 = vmatpush1.xpose.msra.mxu0 %v638
        %644 = vmatprep.subr.mxu0 0.0
        %645 = vmatpush1.xpose.msra.mxu0 0.0
        %646 = vmatprep.subr.mxu0 0.0
        %647 = vmatpush1.xpose.msra.mxu0 0.0
        %648 = vmatprep.subr.mxu0 0.0
        %649 = vmatpush1.xpose.msra.mxu0 0.0
        %650 = vmatprep.subr.mxu0 0.0
        %651 = vmatpush1.xpose.msra.mxu0 0.0
        %652 = vmatprep.subr.mxu0 0.0
        %653 = vmatpush1.xpose.msra.mxu0 0.0
        %654 = vmatprep.subr.mxu0 0.0
        %655 = vmatpush1.xpose.msra.mxu0 0.0
        %656 = vmatprep.subr.mxu0 0.0
        %657 = vmatpush1.xpose.msra.mxu0 0.0
        %658 = vmatprep.subr.mxu0 0.0
        %659 = vmatpush1.xpose.msra.mxu0 0.0
        %660 = vmatprep.subr.mxu0 0.0
        %661 = vmatpush1.xpose.msra.mxu0 0.0
        %662 = vmatprep.subr.mxu0 0.0
        %663 = vmatpush1.xpose.msra.mxu0 0.0
        %664 = vmatprep.subr.mxu0 0.0
        %665 = vmatpush1.xpose.msra.mxu0 0.0
        %666 = vmatprep.subr.mxu0 0.0
        %667 = vmatpush1.xpose.msra.mxu0 0.0
        %668 = vmatprep.subr.mxu0 0.0
        %669 = vmatpush1.xpose.msra.mxu0 0.0
        %670 = vmatprep.subr.mxu0 0.0
        %671 = vmatpush1.xpose.msra.mxu0 0.0
        %672 = vmatprep.subr.mxu0 0.0
        %673 = vmatpush1.xpose.msra.mxu0 0.0
        %674 = vmatprep.subr.mxu0 0.0
        %675 = vmatpush1.xpose.msra.mxu0 0.0
        %676 = vmatprep.subr.mxu0 0.0
        %677 = vmatpush1.xpose.msra.mxu0 0.0
        %678 = vmatprep.subr.mxu0 0.0
        %679 = vmatpush1.xpose.msra.mxu0 0.0
        %680 = vmatprep.subr.mxu0 0.0
        %681 = vmatpush1.xpose.msra.mxu0 0.0
        %682 = vmatprep.subr.mxu0 0.0
        %683 = vmatpush1.xpose.msra.mxu0 0.0
        %684 = vmatprep.subr.mxu0 0.0
        %685 = vmatpush1.xpose.msra.mxu0 0.0
        %686 = vmatprep.subr.mxu0 0.0
        %687 = vmatpush1.xpose.msra.mxu0 0.0
        %688 = vmatprep.subr.mxu0 0.0
        %689 = vmatpush1.xpose.msra.mxu0 0.0
        %690 = vmatprep.subr.mxu0 0.0
        %691 = vmatpush1.xpose.msra.mxu0 0.0
        %692 = vmatprep.subr.mxu0 0.0
        %693 = vmatpush1.xpose.msra.mxu0 0.0
        %694 = vmatprep.subr.mxu0 0.0
        %695 = vmatpush1.xpose.msra.mxu0 0.0
        %696 = vmatprep.subr.mxu0 0.0
        %697 = vmatpush1.xpose.msra.mxu0 0.0
        %698 = vmatprep.subr.mxu0 0.0
        %699 = vmatpush1.xpose.msra.mxu0 0.0
        %700 = vmatprep.subr.mxu0 0.0
        %701 = vmatpush1.xpose.msra.mxu0 0.0
        %702 = vmatprep.subr.mxu0 0.0
        %703 = vmatpush1.xpose.msra.mxu0 0.0
        %704 = vmatprep.mubr.f32.mxu0 0.0
        %705 = vmatmul.mubr.f32.gmra.mrb[0].mxu0 %v632
        %v706 = vpop.f32.mrb[0].mxu0
        %v707 = vadd.f32 0.0, %v706
        %v708 = vpop.f32.mrb[0].mxu0
        %709 = vdwg.mxu0
        %v711 = vsel %vm314, %v279, 0
        %v714 = vsel %vm314, %v292, 0
        %v717 = vsel %vm314, %v293, 0
        %719 = vmatprep.subr.mxu0 0.0
        %720 = vmatpush1.xpose.msra.mxu0 %v714
        %721 = vmatprep.subr.mxu0 0.0
        %722 = vmatpush1.xpose.msra.mxu0 %v717
        %723 = vmatprep.subr.mxu0 0.0
        %724 = vmatpush1.xpose.msra.mxu0 0.0
        %725 = vmatprep.subr.mxu0 0.0
        %726 = vmatpush1.xpose.msra.mxu0 0.0
        %727 = vmatprep.subr.mxu0 0.0
        %728 = vmatpush1.xpose.msra.mxu0 0.0
        %729 = vmatprep.subr.mxu0 0.0
        %730 = vmatpush1.xpose.msra.mxu0 0.0
        %731 = vmatprep.subr.mxu0 0.0
        %732 = vmatpush1.xpose.msra.mxu0 0.0
        %733 = vmatprep.subr.mxu0 0.0
        %734 = vmatpush1.xpose.msra.mxu0 0.0
        %735 = vmatprep.subr.mxu0 0.0
        %736 = vmatpush1.xpose.msra.mxu0 0.0
        %737 = vmatprep.subr.mxu0 0.0
        %738 = vmatpush1.xpose.msra.mxu0 0.0
        %739 = vmatprep.subr.mxu0 0.0
        %740 = vmatpush1.xpose.msra.mxu0 0.0
        %741 = vmatprep.subr.mxu0 0.0
        %742 = vmatpush1.xpose.msra.mxu0 0.0
        %743 = vmatprep.subr.mxu0 0.0
        %744 = vmatpush1.xpose.msra.mxu0 0.0
        %745 = vmatprep.subr.mxu0 0.0
        %746 = vmatpush1.xpose.msra.mxu0 0.0
        %747 = vmatprep.subr.mxu0 0.0
        %748 = vmatpush1.xpose.msra.mxu0 0.0
        %749 = vmatprep.subr.mxu0 0.0
        %750 = vmatpush1.xpose.msra.mxu0 0.0
        %751 = vmatprep.subr.mxu0 0.0
        %752 = vmatpush1.xpose.msra.mxu0 0.0
        %753 = vmatprep.subr.mxu0 0.0
        %754 = vmatpush1.xpose.msra.mxu0 0.0
        %755 = vmatprep.subr.mxu0 0.0
        %756 = vmatpush1.xpose.msra.mxu0 0.0
        %757 = vmatprep.subr.mxu0 0.0
        %758 = vmatpush1.xpose.msra.mxu0 0.0
        %759 = vmatprep.subr.mxu0 0.0
        %760 = vmatpush1.xpose.msra.mxu0 0.0
        %761 = vmatprep.subr.mxu0 0.0
        %762 = vmatpush1.xpose.msra.mxu0 0.0
        %763 = vmatprep.subr.mxu0 0.0
        %764 = vmatpush1.xpose.msra.mxu0 0.0
        %765 = vmatprep.subr.mxu0 0.0
        %766 = vmatpush1.xpose.msra.mxu0 0.0
        %767 = vmatprep.subr.mxu0 0.0
        %768 = vmatpush1.xpose.msra.mxu0 0.0
        %769 = vmatprep.subr.mxu0 0.0
        %770 = vmatpush1.xpose.msra.mxu0 0.0
        %771 = vmatprep.subr.mxu0 0.0
        %772 = vmatpush1.xpose.msra.mxu0 0.0
        %773 = vmatprep.subr.mxu0 0.0
        %774 = vmatpush1.xpose.msra.mxu0 0.0
        %775 = vmatprep.subr.mxu0 0.0
        %776 = vmatpush1.xpose.msra.mxu0 0.0
        %777 = vmatprep.subr.mxu0 0.0
        %778 = vmatpush1.xpose.msra.mxu0 0.0
        %779 = vmatprep.subr.mxu0 0.0
        %780 = vmatpush1.xpose.msra.mxu0 0.0
        %781 = vmatprep.subr.mxu0 0.0
        %782 = vmatpush1.xpose.msra.mxu0 0.0
        %783 = vmatprep.mubr.f32.mxu0 0.0
        %784 = vmatmul.mubr.f32.gmra.mrb[0].mxu0 %v711
        %v785 = vpop.f32.mrb[0].mxu0
        %v786 = vadd.f32 0.0, %v785
        %v787 = vpop.f32.mrb[0].mxu0
        %788 = vdwg.mxu0
        %v790 = vsel %vm314, %v280, 0
        %v793 = vsel %vm314, %v294, 0
        %v796 = vsel %vm314, %v295, 0
        %798 = vmatprep.subr.mxu0 0.0
        %799 = vmatpush1.xpose.msra.mxu0 %v793
        %800 = vmatprep.subr.mxu0 0.0
        %801 = vmatpush1.xpose.msra.mxu0 %v796
        %802 = vmatprep.subr.mxu0 0.0
        %803 = vmatpush1.xpose.msra.mxu0 0.0
        %804 = vmatprep.subr.mxu0 0.0
        %805 = vmatpush1.xpose.msra.mxu0 0.0
        %806 = vmatprep.subr.mxu0 0.0
        %807 = vmatpush1.xpose.msra.mxu0 0.0
        %808 = vmatprep.subr.mxu0 0.0
        %809 = vmatpush1.xpose.msra.mxu0 0.0
        %810 = vmatprep.subr.mxu0 0.0
        %811 = vmatpush1.xpose.msra.mxu0 0.0
        %812 = vmatprep.subr.mxu0 0.0
        %813 = vmatpush1.xpose.msra.mxu0 0.0
        %814 = vmatprep.subr.mxu0 0.0
        %815 = vmatpush1.xpose.msra.mxu0 0.0
        %816 = vmatprep.subr.mxu0 0.0
        %817 = vmatpush1.xpose.msra.mxu0 0.0
        %818 = vmatprep.subr.mxu0 0.0
        %819 = vmatpush1.xpose.msra.mxu0 0.0
        %820 = vmatprep.subr.mxu0 0.0
        %821 = vmatpush1.xpose.msra.mxu0 0.0
        %822 = vmatprep.subr.mxu0 0.0
        %823 = vmatpush1.xpose.msra.mxu0 0.0
        %824 = vmatprep.subr.mxu0 0.0
        %825 = vmatpush1.xpose.msra.mxu0 0.0
        %826 = vmatprep.subr.mxu0 0.0
        %827 = vmatpush1.xpose.msra.mxu0 0.0
        %828 = vmatprep.subr.mxu0 0.0
        %829 = vmatpush1.xpose.msra.mxu0 0.0
        %830 = vmatprep.subr.mxu0 0.0
        %831 = vmatpush1.xpose.msra.mxu0 0.0
        %832 = vmatprep.subr.mxu0 0.0
        %833 = vmatpush1.xpose.msra.mxu0 0.0
        %834 = vmatprep.subr.mxu0 0.0
        %835 = vmatpush1.xpose.msra.mxu0 0.0
        %836 = vmatprep.subr.mxu0 0.0
        %837 = vmatpush1.xpose.msra.mxu0 0.0
        %838 = vmatprep.subr.mxu0 0.0
        %839 = vmatpush1.xpose.msra.mxu0 0.0
        %840 = vmatprep.subr.mxu0 0.0
        %841 = vmatpush1.xpose.msra.mxu0 0.0
        %842 = vmatprep.subr.mxu0 0.0
        %843 = vmatpush1.xpose.msra.mxu0 0.0
        %844 = vmatprep.subr.mxu0 0.0
        %845 = vmatpush1.xpose.msra.mxu0 0.0
        %846 = vmatprep.subr.mxu0 0.0
        %847 = vmatpush1.xpose.msra.mxu0 0.0
        %848 = vmatprep.subr.mxu0 0.0
        %849 = vmatpush1.xpose.msra.mxu0 0.0
        %850 = vmatprep.subr.mxu0 0.0
        %851 = vmatpush1.xpose.msra.mxu0 0.0
        %852 = vmatprep.subr.mxu0 0.0
        %853 = vmatpush1.xpose.msra.mxu0 0.0
        %854 = vmatprep.subr.mxu0 0.0
        %855 = vmatpush1.xpose.msra.mxu0 0.0
        %856 = vmatprep.subr.mxu0 0.0
        %857 = vmatpush1.xpose.msra.mxu0 0.0
        %858 = vmatprep.subr.mxu0 0.0
        %859 = vmatpush1.xpose.msra.mxu0 0.0
        %860 = vmatprep.subr.mxu0 0.0
        %861 = vmatpush1.xpose.msra.mxu0 0.0
        %862 = vmatprep.mubr.f32.mxu0 0.0
        %863 = vmatmul.mubr.f32.gmra.mrb[0].mxu0 %v790
        %v864 = vpop.f32.mrb[0].mxu0
        %v865 = vadd.f32 0.0, %v864
        %v866 = vpop.f32.mrb[0].mxu0
        %867 = vdwg.mxu0
        %v869 = vsel %vm314, %v281, 0
        %v872 = vsel %vm314, %v296, 0
        %v875 = vsel %vm314, %v297, 0
        %877 = vmatprep.subr.mxu0 0.0
        %878 = vmatpush1.xpose.msra.mxu0 %v872
        %879 = vmatprep.subr.mxu0 0.0
        %880 = vmatpush1.xpose.msra.mxu0 %v875
        %881 = vmatprep.subr.mxu0 0.0
        %882 = vmatpush1.xpose.msra.mxu0 0.0
        %883 = vmatprep.subr.mxu0 0.0
        %884 = vmatpush1.xpose.msra.mxu0 0.0
        %885 = vmatprep.subr.mxu0 0.0
        %886 = vmatpush1.xpose.msra.mxu0 0.0
        %887 = vmatprep.subr.mxu0 0.0
        %888 = vmatpush1.xpose.msra.mxu0 0.0
        %889 = vmatprep.subr.mxu0 0.0
        %890 = vmatpush1.xpose.msra.mxu0 0.0
        %891 = vmatprep.subr.mxu0 0.0
        %892 = vmatpush1.xpose.msra.mxu0 0.0
        %893 = vmatprep.subr.mxu0 0.0
        %894 = vmatpush1.xpose.msra.mxu0 0.0
        %895 = vmatprep.subr.mxu0 0.0
        %896 = vmatpush1.xpose.msra.mxu0 0.0
        %897 = vmatprep.subr.mxu0 0.0
        %898 = vmatpush1.xpose.msra.mxu0 0.0
        %899 = vmatprep.subr.mxu0 0.0
        %900 = vmatpush1.xpose.msra.mxu0 0.0
        %901 = vmatprep.subr.mxu0 0.0
        %902 = vmatpush1.xpose.msra.mxu0 0.0
        %903 = vmatprep.subr.mxu0 0.0
        %904 = vmatpush1.xpose.msra.mxu0 0.0
        %905 = vmatprep.subr.mxu0 0.0
        %906 = vmatpush1.xpose.msra.mxu0 0.0
        %907 = vmatprep.subr.mxu0 0.0
        %908 = vmatpush1.xpose.msra.mxu0 0.0
        %909 = vmatprep.subr.mxu0 0.0
        %910 = vmatpush1.xpose.msra.mxu0 0.0
        %911 = vmatprep.subr.mxu0 0.0
        %912 = vmatpush1.xpose.msra.mxu0 0.0
        %913 = vmatprep.subr.mxu0 0.0
        %914 = vmatpush1.xpose.msra.mxu0 0.0
        %915 = vmatprep.subr.mxu0 0.0
        %916 = vmatpush1.xpose.msra.mxu0 0.0
        %917 = vmatprep.subr.mxu0 0.0
        %918 = vmatpush1.xpose.msra.mxu0 0.0
        %919 = vmatprep.subr.mxu0 0.0
        %920 = vmatpush1.xpose.msra.mxu0 0.0
        %921 = vmatprep.subr.mxu0 0.0
        %922 = vmatpush1.xpose.msra.mxu0 0.0
        %923 = vmatprep.subr.mxu0 0.0
        %924 = vmatpush1.xpose.msra.mxu0 0.0
        %925 = vmatprep.subr.mxu0 0.0
        %926 = vmatpush1.xpose.msra.mxu0 0.0
        %927 = vmatprep.subr.mxu0 0.0
        %928 = vmatpush1.xpose.msra.mxu0 0.0
        %929 = vmatprep.subr.mxu0 0.0
        %930 = vmatpush1.xpose.msra.mxu0 0.0
        %931 = vmatprep.subr.mxu0 0.0
        %932 = vmatpush1.xpose.msra.mxu0 0.0
        %933 = vmatprep.subr.mxu0 0.0
        %934 = vmatpush1.xpose.msra.mxu0 0.0
        %935 = vmatprep.subr.mxu0 0.0
        %936 = vmatpush1.xpose.msra.mxu0 0.0
        %937 = vmatprep.subr.mxu0 0.0
        %938 = vmatpush1.xpose.msra.mxu0 0.0
        %939 = vmatprep.subr.mxu0 0.0
        %940 = vmatpush1.xpose.msra.mxu0 0.0
        %941 = vmatprep.mubr.f32.mxu0 0.0
        %942 = vmatmul.mubr.f32.gmra.mrb[0].mxu0 %v869
        %v943 = vpop.f32.mrb[0].mxu0
        %v944 = vadd.f32 0.0, %v943
        %v945 = vpop.f32.mrb[0].mxu0
        %946 = vdwg.mxu0
        %v947 = vsel %vm314, %v391, -inf
        %948 = vmax.xlane.f32.xlu0 %v947
        %v949 = vpop.xlane.xlu0 %948
        %v950 = vsel %vm314, %v470, -inf
        %951 = vmax.xlane.f32.xlu0 %v950
        %v952 = vpop.xlane.xlu0 %951
        %v953 = vsel %vm314, %v549, -inf
        %954 = vmax.xlane.f32.xlu0 %v953
        %v955 = vpop.xlane.xlu0 %954
        %v956 = vsel %vm314, %v628, -inf
        %957 = vmax.xlane.f32.xlu0 %v956
        %v958 = vpop.xlane.xlu0 %957
        %v959 = vsel %vm314, %v707, -inf
        %960 = vmax.xlane.f32.xlu0 %v959
        %v961 = vpop.xlane.xlu0 %960
        %v962 = vsel %vm314, %v786, -inf
        %963 = vmax.xlane.f32.xlu0 %v962
        %v964 = vpop.xlane.xlu0 %963
        %v965 = vsel %vm314, %v865, -inf
        %966 = vmax.xlane.f32.xlu0 %v965
        %v967 = vpop.xlane.xlu0 %966
        %v968 = vsel %vm314, %v944, -inf
        %969 = vmax.xlane.f32.xlu0 %v968
        %v970 = vpop.xlane.xlu0 %969
        %v971 = vsub.f32 %v391, %v949
        %v972 = vsub.f32 %v470, %v952
        %v973 = vsub.f32 %v549, %v955
        %v974 = vsub.f32 %v628, %v958
        %v975 = vsub.f32 %v707, %v961
        %v976 = vsub.f32 %v786, %v964
        %v977 = vsub.f32 %v865, %v967
        %v978 = vsub.f32 %v944, %v970
        %v979 = vmul.f32 %v971, 1.442695
        %v980 = vpow.pop %v979
        %v981 = vmul.f32 %v972, 1.442695
        %v982 = vpow.pop %v981
        %v983 = vmul.f32 %v973, 1.442695
        %v984 = vpow.pop %v983
        %v985 = vmul.f32 %v974, 1.442695
        %v986 = vpow.pop %v985
        %v987 = vmul.f32 %v975, 1.442695
        %v988 = vpow.pop %v987
        %v989 = vmul.f32 %v976, 1.442695
        %v990 = vpow.pop %v989
        %v991 = vmul.f32 %v977, 1.442695
        %v992 = vpow.pop %v991
        %v993 = vmul.f32 %v978, 1.442695
        %v994 = vpow.pop %v993
        %v995 = vsel %vm314, %v980, 0.0
        %996 = vadd.xlane.f32.xlu0 %v995
        %v997 = vpop.xlane.xlu0 %996
        %v998 = vsel %vm314, %v982, 0.0
        %999 = vadd.xlane.f32.xlu0 %v998
        %v1000 = vpop.xlane.xlu0 %999
        %v1001 = vsel %vm314, %v984, 0.0
        %1002 = vadd.xlane.f32.xlu0 %v1001
        %v1003 = vpop.xlane.xlu0 %1002
        %v1004 = vsel %vm314, %v986, 0.0
        %1005 = vadd.xlane.f32.xlu0 %v1004
        %v1006 = vpop.xlane.xlu0 %1005
        %v1007 = vsel %vm314, %v988, 0.0
        %1008 = vadd.xlane.f32.xlu0 %v1007
        %v1009 = vpop.xlane.xlu0 %1008
        %v1010 = vsel %vm314, %v990, 0.0
        %1011 = vadd.xlane.f32.xlu0 %v1010
        %v1012 = vpop.xlane.xlu0 %1011
        %v1013 = vsel %vm314, %v992, 0.0
        %1014 = vadd.xlane.f32.xlu0 %v1013
        %v1015 = vpop.xlane.xlu0 %1014
        %v1016 = vsel %vm314, %v994, 0.0
        %1017 = vadd.xlane.f32.xlu0 %v1016
        %v1018 = vpop.xlane.xlu0 %1017
        %v1019 = vrcp.pop %v997
        %v1020 = vrcp.pop %v1000
        %v1021 = vrcp.pop %v1003
        %v1022 = vrcp.pop %v1006
        %v1023 = vrcp.pop %v1009
        %v1024 = vrcp.pop %v1012
        %v1025 = vrcp.pop %v1015
        %v1026 = vrcp.pop %v1018
        %v1027 = vmul.f32 %v980, %v1019
        %v1028 = vmul.f32 %v982, %v1020
        %v1029 = vmul.f32 %v984, %v1021
        %v1030 = vmul.f32 %v986, %v1022
        %v1031 = vmul.f32 %v988, %v1023
        %v1032 = vmul.f32 %v990, %v1024
        %v1033 = vmul.f32 %v992, %v1025
        %v1034 = vmul.f32 %v994, %v1026
        %v1036 = vsel %vm314, %v1027, 0
        %1038 = vmatprep.subr.mxu0 0.0
        %1039 = vmatpush1.msra.mxu0 %v298
        %1040 = vmatprep.subr.mxu0 0.0
        %1041 = vmatpush1.msra.mxu0 %v299
        %1042 = vmatprep.subr.mxu0 0.0
        %1043 = vmatpush1.msra.mxu0 0.0
        %1044 = vmatprep.subr.mxu0 0.0
        %1045 = vmatpush1.msra.mxu0 0.0
        %1046 = vmatprep.subr.mxu0 0.0
        %1047 = vmatpush1.msra.mxu0 0.0
        %1048 = vmatprep.subr.mxu0 0.0
        %1049 = vmatpush1.msra.mxu0 0.0
        %1050 = vmatprep.subr.mxu0 0.0
        %1051 = vmatpush1.msra.mxu0 0.0
        %1052 = vmatprep.subr.mxu0 0.0
        %1053 = vmatpush1.msra.mxu0 0.0
        %1054 = vmatprep.subr.mxu0 0.0
        %1055 = vmatpush1.msra.mxu0 0.0
        %1056 = vmatprep.subr.mxu0 0.0
        %1057 = vmatpush1.msra.mxu0 0.0
        %1058 = vmatprep.subr.mxu0 0.0
        %1059 = vmatpush1.msra.mxu0 0.0
        %1060 = vmatprep.subr.mxu0 0.0
        %1061 = vmatpush1.msra.mxu0 0.0
        %1062 = vmatprep.subr.mxu0 0.0
        %1063 = vmatpush1.msra.mxu0 0.0
        %1064 = vmatprep.subr.mxu0 0.0
        %1065 = vmatpush1.msra.mxu0 0.0
        %1066 = vmatprep.subr.mxu0 0.0
        %1067 = vmatpush1.msra.mxu0 0.0
        %1068 = vmatprep.subr.mxu0 0.0
        %1069 = vmatpush1.msra.mxu0 0.0
        %1070 = vmatprep.subr.mxu0 0.0
        %1071 = vmatpush1.msra.mxu0 0.0
        %1072 = vmatprep.subr.mxu0 0.0
        %1073 = vmatpush1.msra.mxu0 0.0
        %1074 = vmatprep.subr.mxu0 0.0
        %1075 = vmatpush1.msra.mxu0 0.0
        %1076 = vmatprep.subr.mxu0 0.0
        %1077 = vmatpush1.msra.mxu0 0.0
        %1078 = vmatprep.subr.mxu0 0.0
        %1079 = vmatpush1.msra.mxu0 0.0
        %1080 = vmatprep.subr.mxu0 0.0
        %1081 = vmatpush1.msra.mxu0 0.0
        %1082 = vmatprep.subr.mxu0 0.0
        %1083 = vmatpush1.msra.mxu0 0.0
        %1084 = vmatprep.subr.mxu0 0.0
        %1085 = vmatpush1.msra.mxu0 0.0
        %1086 = vmatprep.subr.mxu0 0.0
        %1087 = vmatpush1.msra.mxu0 0.0
        %1088 = vmatprep.subr.mxu0 0.0
        %1089 = vmatpush1.msra.mxu0 0.0
        %1090 = vmatprep.subr.mxu0 0.0
        %1091 = vmatpush1.msra.mxu0 0.0
        %1092 = vmatprep.subr.mxu0 0.0
        %1093 = vmatpush1.msra.mxu0 0.0
        %1094 = vmatprep.subr.mxu0 0.0
        %1095 = vmatpush1.msra.mxu0 0.0
        %1096 = vmatprep.subr.mxu0 0.0
        %1097 = vmatpush1.msra.mxu0 0.0
        %1098 = vmatprep.subr.mxu0 0.0
        %1099 = vmatpush1.msra.mxu0 0.0
        %1100 = vmatprep.subr.mxu0 0.0
        %1101 = vmatpush1.msra.mxu0 0.0
        %1102 = vmatprep.mubr.f32.mxu0 0.0
        %1103 = vmatmul.mubr.f32.gmra.mrb[0].mxu0 %v1036
        %v1104 = vpop.f32.mrb[0].mxu0
        %v1105 = vadd.f32 0.0, %v1104
        %v1106 = vpop.f32.mrb[0].mxu0
        %1107 = vdwg.mxu0
        %v1109 = vsel %vm314, %v1028, 0
        %1111 = vmatprep.subr.mxu0 0.0
        %1112 = vmatpush1.msra.mxu0 %v300
        %1113 = vmatprep.subr.mxu0 0.0
        %1114 = vmatpush1.msra.mxu0 %v301
        %1115 = vmatprep.subr.mxu0 0.0
        %1116 = vmatpush1.msra.mxu0 0.0
        %1117 = vmatprep.subr.mxu0 0.0
        %1118 = vmatpush1.msra.mxu0 0.0
        %1119 = vmatprep.subr.mxu0 0.0
        %1120 = vmatpush1.msra.mxu0 0.0
        %1121 = vmatprep.subr.mxu0 0.0
        %1122 = vmatpush1.msra.mxu0 0.0
        %1123 = vmatprep.subr.mxu0 0.0
        %1124 = vmatpush1.msra.mxu0 0.0
        %1125 = vmatprep.subr.mxu0 0.0
        %1126 = vmatpush1.msra.mxu0 0.0
        %1127 = vmatprep.subr.mxu0 0.0
        %1128 = vmatpush1.msra.mxu0 0.0
        %1129 = vmatprep.subr.mxu0 0.0
        %1130 = vmatpush1.msra.mxu0 0.0
        %1131 = vmatprep.subr.mxu0 0.0
        %1132 = vmatpush1.msra.mxu0 0.0
        %1133 = vmatprep.subr.mxu0 0.0
        %1134 = vmatpush1.msra.mxu0 0.0
        %1135 = vmatprep.subr.mxu0 0.0
        %1136 = vmatpush1.msra.mxu0 0.0
        %1137 = vmatprep.subr.mxu0 0.0
        %1138 = vmatpush1.msra.mxu0 0.0
        %1139 = vmatprep.subr.mxu0 0.0
        %1140 = vmatpush1.msra.mxu0 0.0
        %1141 = vmatprep.subr.mxu0 0.0
        %1142 = vmatpush1.msra.mxu0 0.0
        %1143 = vmatprep.subr.mxu0 0.0
        %1144 = vmatpush1.msra.mxu0 0.0
        %1145 = vmatprep.subr.mxu0 0.0
        %1146 = vmatpush1.msra.mxu0 0.0
        %1147 = vmatprep.subr.mxu0 0.0
        %1148 = vmatpush1.msra.mxu0 0.0
        %1149 = vmatprep.subr.mxu0 0.0
        %1150 = vmatpush1.msra.mxu0 0.0
        %1151 = vmatprep.subr.mxu0 0.0
        %1152 = vmatpush1.msra.mxu0 0.0
        %1153 = vmatprep.subr.mxu0 0.0
        %1154 = vmatpush1.msra.mxu0 0.0
        %1155 = vmatprep.subr.mxu0 0.0
        %1156 = vmatpush1.msra.mxu0 0.0
        %1157 = vmatprep.subr.mxu0 0.0
        %1158 = vmatpush1.msra.mxu0 0.0
        %1159 = vmatprep.subr.mxu0 0.0
        %1160 = vmatpush1.msra.mxu0 0.0
        %1161 = vmatprep.subr.mxu0 0.0
        %1162 = vmatpush1.msra.mxu0 0.0
        %1163 = vmatprep.subr.mxu0 0.0
        %1164 = vmatpush1.msra.mxu0 0.0
        %1165 = vmatprep.subr.mxu0 0.0
        %1166 = vmatpush1.msra.mxu0 0.0
        %1167 = vmatprep.subr.mxu0 0.0
        %1168 = vmatpush1.msra.mxu0 0.0
        %1169 = vmatprep.subr.mxu0 0.0
        %1170 = vmatpush1.msra.mxu0 0.0
        %1171 = vmatprep.subr.mxu0 0.0
        %1172 = vmatpush1.msra.mxu0 0.0
        %1173 = vmatprep.subr.mxu0 0.0
        %1174 = vmatpush1.msra.mxu0 0.0
        %1175 = vmatprep.mubr.f32.mxu0 0.0
        %1176 = vmatmul.mubr.f32.gmra.mrb[0].mxu0 %v1109
        %v1177 = vpop.f32.mrb[0].mxu0
        %v1178 = vadd.f32 0.0, %v1177
        %v1179 = vpop.f32.mrb[0].mxu0
        %1180 = vdwg.mxu0
        %v1182 = vsel %vm314, %v1029, 0
        %1184 = vmatprep.subr.mxu0 0.0
        %1185 = vmatpush1.msra.mxu0 %v302
        %1186 = vmatprep.subr.mxu0 0.0
        %1187 = vmatpush1.msra.mxu0 %v303
        %1188 = vmatprep.subr.mxu0 0.0
        %1189 = vmatpush1.msra.mxu0 0.0
        %1190 = vmatprep.subr.mxu0 0.0
        %1191 = vmatpush1.msra.mxu0 0.0
        %1192 = vmatprep.subr.mxu0 0.0
        %1193 = vmatpush1.msra.mxu0 0.0
        %1194 = vmatprep.subr.mxu0 0.0
        %1195 = vmatpush1.msra.mxu0 0.0
        %1196 = vmatprep.subr.mxu0 0.0
        %1197 = vmatpush1.msra.mxu0 0.0
        %1198 = vmatprep.subr.mxu0 0.0
        %1199 = vmatpush1.msra.mxu0 0.0
        %1200 = vmatprep.subr.mxu0 0.0
        %1201 = vmatpush1.msra.mxu0 0.0
        %1202 = vmatprep.subr.mxu0 0.0
        %1203 = vmatpush1.msra.mxu0 0.0
        %1204 = vmatprep.subr.mxu0 0.0
        %1205 = vmatpush1.msra.mxu0 0.0
        %1206 = vmatprep.subr.mxu0 0.0
        %1207 = vmatpush1.msra.mxu0 0.0
        %1208 = vmatprep.subr.mxu0 0.0
        %1209 = vmatpush1.msra.mxu0 0.0
        %1210 = vmatprep.subr.mxu0 0.0
        %1211 = vmatpush1.msra.mxu0 0.0
        %1212 = vmatprep.subr.mxu0 0.0
        %1213 = vmatpush1.msra.mxu0 0.0
        %1214 = vmatprep.subr.mxu0 0.0
        %1215 = vmatpush1.msra.mxu0 0.0
        %1216 = vmatprep.subr.mxu0 0.0
        %1217 = vmatpush1.msra.mxu0 0.0
        %1218 = vmatprep.subr.mxu0 0.0
        %1219 = vmatpush1.msra.mxu0 0.0
        %1220 = vmatprep.subr.mxu0 0.0
        %1221 = vmatpush1.msra.mxu0 0.0
        %1222 = vmatprep.subr.mxu0 0.0
        %1223 = vmatpush1.msra.mxu0 0.0
        %1224 = vmatprep.subr.mxu0 0.0
        %1225 = vmatpush1.msra.mxu0 0.0
        %1226 = vmatprep.subr.mxu0 0.0
        %1227 = vmatpush1.msra.mxu0 0.0
        %1228 = vmatprep.subr.mxu0 0.0
        %1229 = vmatpush1.msra.mxu0 0.0
        %1230 = vmatprep.subr.mxu0 0.0
        %1231 = vmatpush1.msra.mxu0 0.0
        %1232 = vmatprep.subr.mxu0 0.0
        %1233 = vmatpush1.msra.mxu0 0.0
        %1234 = vmatprep.subr.mxu0 0.0
        %1235 = vmatpush1.msra.mxu0 0.0
        %1236 = vmatprep.subr.mxu0 0.0
        %1237 = vmatpush1.msra.mxu0 0.0
        %1238 = vmatprep.subr.mxu0 0.0
        %1239 = vmatpush1.msra.mxu0 0.0
        %1240 = vmatprep.subr.mxu0 0.0
        %1241 = vmatpush1.msra.mxu0 0.0
        %1242 = vmatprep.subr.mxu0 0.0
        %1243 = vmatpush1.msra.mxu0 0.0
        %1244 = vmatprep.subr.mxu0 0.0
        %1245 = vmatpush1.msra.mxu0 0.0
        %1246 = vmatprep.subr.mxu0 0.0
        %1247 = vmatpush1.msra.mxu0 0.0
        %1248 = vmatprep.mubr.f32.mxu0 0.0
        %1249 = vmatmul.mubr.f32.gmra.mrb[0].mxu0 %v1182
        %v1250 = vpop.f32.mrb[0].mxu0
        %v1251 = vadd.f32 0.0, %v1250
        %v1252 = vpop.f32.mrb[0].mxu0
        %1253 = vdwg.mxu0
        %v1255 = vsel %vm314, %v1030, 0
        %1257 = vmatprep.subr.mxu0 0.0
        %1258 = vmatpush1.msra.mxu0 %v304
        %1259 = vmatprep.subr.mxu0 0.0
        %1260 = vmatpush1.msra.mxu0 %v305
        %1261 = vmatprep.subr.mxu0 0.0
        %1262 = vmatpush1.msra.mxu0 0.0
        %1263 = vmatprep.subr.mxu0 0.0
        %1264 = vmatpush1.msra.mxu0 0.0
        %1265 = vmatprep.subr.mxu0 0.0
        %1266 = vmatpush1.msra.mxu0 0.0
        %1267 = vmatprep.subr.mxu0 0.0
        %1268 = vmatpush1.msra.mxu0 0.0
        %1269 = vmatprep.subr.mxu0 0.0
        %1270 = vmatpush1.msra.mxu0 0.0
        %1271 = vmatprep.subr.mxu0 0.0
        %1272 = vmatpush1.msra.mxu0 0.0
        %1273 = vmatprep.subr.mxu0 0.0
        %1274 = vmatpush1.msra.mxu0 0.0
        %1275 = vmatprep.subr.mxu0 0.0
        %1276 = vmatpush1.msra.mxu0 0.0
        %1277 = vmatprep.subr.mxu0 0.0
        %1278 = vmatpush1.msra.mxu0 0.0
        %1279 = vmatprep.subr.mxu0 0.0
        %1280 = vmatpush1.msra.mxu0 0.0
        %1281 = vmatprep.subr.mxu0 0.0
        %1282 = vmatpush1.msra.mxu0 0.0
        %1283 = vmatprep.subr.mxu0 0.0
        %1284 = vmatpush1.msra.mxu0 0.0
        %1285 = vmatprep.subr.mxu0 0.0
        %1286 = vmatpush1.msra.mxu0 0.0
        %1287 = vmatprep.subr.mxu0 0.0
        %1288 = vmatpush1.msra.mxu0 0.0
        %1289 = vmatprep.subr.mxu0 0.0
        %1290 = vmatpush1.msra.mxu0 0.0
        %1291 = vmatprep.subr.mxu0 0.0
        %1292 = vmatpush1.msra.mxu0 0.0
        %1293 = vmatprep.subr.mxu0 0.0
        %1294 = vmatpush1.msra.mxu0 0.0
        %1295 = vmatprep.subr.mxu0 0.0
        %1296 = vmatpush1.msra.mxu0 0.0
        %1297 = vmatprep.subr.mxu0 0.0
        %1298 = vmatpush1.msra.mxu0 0.0
        %1299 = vmatprep.subr.mxu0 0.0
        %1300 = vmatpush1.msra.mxu0 0.0
        %1301 = vmatprep.subr.mxu0 0.0
        %1302 = vmatpush1.msra.mxu0 0.0
        %1303 = vmatprep.subr.mxu0 0.0
        %1304 = vmatpush1.msra.mxu0 0.0
        %1305 = vmatprep.subr.mxu0 0.0
        %1306 = vmatpush1.msra.mxu0 0.0
        %1307 = vmatprep.subr.mxu0 0.0
        %1308 = vmatpush1.msra.mxu0 0.0
        %1309 = vmatprep.subr.mxu0 0.0
        %1310 = vmatpush1.msra.mxu0 0.0
        %1311 = vmatprep.subr.mxu0 0.0
        %1312 = vmatpush1.msra.mxu0 0.0
        %1313 = vmatprep.subr.mxu0 0.0
        %1314 = vmatpush1.msra.mxu0 0.0
        %1315 = vmatprep.subr.mxu0 0.0
        %1316 = vmatpush1.msra.mxu0 0.0
        %1317 = vmatprep.subr.mxu0 0.0
        %1318 = vmatpush1.msra.mxu0 0.0
        %1319 = vmatprep.subr.mxu0 0.0
        %1320 = vmatpush1.msra.mxu0 0.0
        %1321 = vmatprep.mubr.f32.mxu0 0.0
        %1322 = vmatmul.mubr.f32.gmra.mrb[0].mxu0 %v1255
        %v1323 = vpop.f32.mrb[0].mxu0
        %v1324 = vadd.f32 0.0, %v1323
        %v1325 = vpop.f32.mrb[0].mxu0
        %1326 = vdwg.mxu0
        %v1328 = vsel %vm314, %v1031, 0
        %1330 = vmatprep.subr.mxu0 0.0
        %1331 = vmatpush1.msra.mxu0 %v306
        %1332 = vmatprep.subr.mxu0 0.0
        %1333 = vmatpush1.msra.mxu0 %v307
        %1334 = vmatprep.subr.mxu0 0.0
        %1335 = vmatpush1.msra.mxu0 0.0
        %1336 = vmatprep.subr.mxu0 0.0
        %1337 = vmatpush1.msra.mxu0 0.0
        %1338 = vmatprep.subr.mxu0 0.0
        %1339 = vmatpush1.msra.mxu0 0.0
        %1340 = vmatprep.subr.mxu0 0.0
        %1341 = vmatpush1.msra.mxu0 0.0
        %1342 = vmatprep.subr.mxu0 0.0
        %1343 = vmatpush1.msra.mxu0 0.0
        %1344 = vmatprep.subr.mxu0 0.0
        %1345 = vmatpush1.msra.mxu0 0.0
        %1346 = vmatprep.subr.mxu0 0.0
        %1347 = vmatpush1.msra.mxu0 0.0
        %1348 = vmatprep.subr.mxu0 0.0
        %1349 = vmatpush1.msra.mxu0 0.0
        %1350 = vmatprep.subr.mxu0 0.0
        %1351 = vmatpush1.msra.mxu0 0.0
        %1352 = vmatprep.subr.mxu0 0.0
        %1353 = vmatpush1.msra.mxu0 0.0
        %1354 = vmatprep.subr.mxu0 0.0
        %1355 = vmatpush1.msra.mxu0 0.0
        %1356 = vmatprep.subr.mxu0 0.0
        %1357 = vmatpush1.msra.mxu0 0.0
        %1358 = vmatprep.subr.mxu0 0.0
        %1359 = vmatpush1.msra.mxu0 0.0
        %1360 = vmatprep.subr.mxu0 0.0
        %1361 = vmatpush1.msra.mxu0 0.0
        %1362 = vmatprep.subr.mxu0 0.0
        %1363 = vmatpush1.msra.mxu0 0.0
        %1364 = vmatprep.subr.mxu0 0.0
        %1365 = vmatpush1.msra.mxu0 0.0
        %1366 = vmatprep.subr.mxu0 0.0
        %1367 = vmatpush1.msra.mxu0 0.0
        %1368 = vmatprep.subr.mxu0 0.0
        %1369 = vmatpush1.msra.mxu0 0.0
        %1370 = vmatprep.subr.mxu0 0.0
        %1371 = vmatpush1.msra.mxu0 0.0
        %1372 = vmatprep.subr.mxu0 0.0
        %1373 = vmatpush1.msra.mxu0 0.0
        %1374 = vmatprep.subr.mxu0 0.0
        %1375 = vmatpush1.msra.mxu0 0.0
        %1376 = vmatprep.subr.mxu0 0.0
        %1377 = vmatpush1.msra.mxu0 0.0
        %1378 = vmatprep.subr.mxu0 0.0
        %1379 = vmatpush1.msra.mxu0 0.0
        %1380 = vmatprep.subr.mxu0 0.0
        %1381 = vmatpush1.msra.mxu0 0.0
        %1382 = vmatprep.subr.mxu0 0.0
        %1383 = vmatpush1.msra.mxu0 0.0
        %1384 = vmatprep.subr.mxu0 0.0
        %1385 = vmatpush1.msra.mxu0 0.0
        %1386 = vmatprep.subr.mxu0 0.0
        %1387 = vmatpush1.msra.mxu0 0.0
        %1388 = vmatprep.subr.mxu0 0.0
        %1389 = vmatpush1.msra.mxu0 0.0
        %1390 = vmatprep.subr.mxu0 0.0
        %1391 = vmatpush1.msra.mxu0 0.0
        %1392 = vmatprep.subr.mxu0 0.0
        %1393 = vmatpush1.msra.mxu0 0.0
        %1394 = vmatprep.mubr.f32.mxu0 0.0
        %1395 = vmatmul.mubr.f32.gmra.mrb[0].mxu0 %v1328
        %v1396 = vpop.f32.mrb[0].mxu0
        %v1397 = vadd.f32 0.0, %v1396
        %v1398 = vpop.f32.mrb[0].mxu0
        %1399 = vdwg.mxu0
        %v1401 = vsel %vm314, %v1032, 0
        %1403 = vmatprep.subr.mxu0 0.0
        %1404 = vmatpush1.msra.mxu0 %v308
        %1405 = vmatprep.subr.mxu0 0.0
        %1406 = vmatpush1.msra.mxu0 %v309
        %1407 = vmatprep.subr.mxu0 0.0
        %1408 = vmatpush1.msra.mxu0 0.0
        %1409 = vmatprep.subr.mxu0 0.0
        %1410 = vmatpush1.msra.mxu0 0.0
        %1411 = vmatprep.subr.mxu0 0.0
        %1412 = vmatpush1.msra.mxu0 0.0
        %1413 = vmatprep.subr.mxu0 0.0
        %1414 = vmatpush1.msra.mxu0 0.0
        %1415 = vmatprep.subr.mxu0 0.0
        %1416 = vmatpush1.msra.mxu0 0.0
        %1417 = vmatprep.subr.mxu0 0.0
        %1418 = vmatpush1.msra.mxu0 0.0
        %1419 = vmatprep.subr.mxu0 0.0
        %1420 = vmatpush1.msra.mxu0 0.0
        %1421 = vmatprep.subr.mxu0 0.0
        %1422 = vmatpush1.msra.mxu0 0.0
        %1423 = vmatprep.subr.mxu0 0.0
        %1424 = vmatpush1.msra.mxu0 0.0
        %1425 = vmatprep.subr.mxu0 0.0
        %1426 = vmatpush1.msra.mxu0 0.0
        %1427 = vmatprep.subr.mxu0 0.0
        %1428 = vmatpush1.msra.mxu0 0.0
        %1429 = vmatprep.subr.mxu0 0.0
        %1430 = vmatpush1.msra.mxu0 0.0
        %1431 = vmatprep.subr.mxu0 0.0
        %1432 = vmatpush1.msra.mxu0 0.0
        %1433 = vmatprep.subr.mxu0 0.0
        %1434 = vmatpush1.msra.mxu0 0.0
        %1435 = vmatprep.subr.mxu0 0.0
        %1436 = vmatpush1.msra.mxu0 0.0
        %1437 = vmatprep.subr.mxu0 0.0
        %1438 = vmatpush1.msra.mxu0 0.0
        %1439 = vmatprep.subr.mxu0 0.0
        %1440 = vmatpush1.msra.mxu0 0.0
        %1441 = vmatprep.subr.mxu0 0.0
        %1442 = vmatpush1.msra.mxu0 0.0
        %1443 = vmatprep.subr.mxu0 0.0
        %1444 = vmatpush1.msra.mxu0 0.0
        %1445 = vmatprep.subr.mxu0 0.0
        %1446 = vmatpush1.msra.mxu0 0.0
        %1447 = vmatprep.subr.mxu0 0.0
        %1448 = vmatpush1.msra.mxu0 0.0
        %1449 = vmatprep.subr.mxu0 0.0
        %1450 = vmatpush1.msra.mxu0 0.0
        %1451 = vmatprep.subr.mxu0 0.0
        %1452 = vmatpush1.msra.mxu0 0.0
        %1453 = vmatprep.subr.mxu0 0.0
        %1454 = vmatpush1.msra.mxu0 0.0
        %1455 = vmatprep.subr.mxu0 0.0
        %1456 = vmatpush1.msra.mxu0 0.0
        %1457 = vmatprep.subr.mxu0 0.0
        %1458 = vmatpush1.msra.mxu0 0.0
        %1459 = vmatprep.subr.mxu0 0.0
        %1460 = vmatpush1.msra.mxu0 0.0
        %1461 = vmatprep.subr.mxu0 0.0
        %1462 = vmatpush1.msra.mxu0 0.0
        %1463 = vmatprep.subr.mxu0 0.0
        %1464 = vmatpush1.msra.mxu0 0.0
        %1465 = vmatprep.subr.mxu0 0.0
        %1466 = vmatpush1.msra.mxu0 0.0
        %1467 = vmatprep.mubr.f32.mxu0 0.0
        %1468 = vmatmul.mubr.f32.gmra.mrb[0].mxu0 %v1401
        %v1469 = vpop.f32.mrb[0].mxu0
        %v1470 = vadd.f32 0.0, %v1469
        %v1471 = vpop.f32.mrb[0].mxu0
        %1472 = vdwg.mxu0
        %v1474 = vsel %vm314, %v1033, 0
        %1476 = vmatprep.subr.mxu0 0.0
        %1477 = vmatpush1.msra.mxu0 %v310
        %1478 = vmatprep.subr.mxu0 0.0
        %1479 = vmatpush1.msra.mxu0 %v311
        %1480 = vmatprep.subr.mxu0 0.0
        %1481 = vmatpush1.msra.mxu0 0.0
        %1482 = vmatprep.subr.mxu0 0.0
        %1483 = vmatpush1.msra.mxu0 0.0
        %1484 = vmatprep.subr.mxu0 0.0
        %1485 = vmatpush1.msra.mxu0 0.0
        %1486 = vmatprep.subr.mxu0 0.0
        %1487 = vmatpush1.msra.mxu0 0.0
        %1488 = vmatprep.subr.mxu0 0.0
        %1489 = vmatpush1.msra.mxu0 0.0
        %1490 = vmatprep.subr.mxu0 0.0
        %1491 = vmatpush1.msra.mxu0 0.0
        %1492 = vmatprep.subr.mxu0 0.0
        %1493 = vmatpush1.msra.mxu0 0.0
        %1494 = vmatprep.subr.mxu0 0.0
        %1495 = vmatpush1.msra.mxu0 0.0
        %1496 = vmatprep.subr.mxu0 0.0
        %1497 = vmatpush1.msra.mxu0 0.0
        %1498 = vmatprep.subr.mxu0 0.0
        %1499 = vmatpush1.msra.mxu0 0.0
        %1500 = vmatprep.subr.mxu0 0.0
        %1501 = vmatpush1.msra.mxu0 0.0
        %1502 = vmatprep.subr.mxu0 0.0
        %1503 = vmatpush1.msra.mxu0 0.0
        %1504 = vmatprep.subr.mxu0 0.0
        %1505 = vmatpush1.msra.mxu0 0.0
        %1506 = vmatprep.subr.mxu0 0.0
        %1507 = vmatpush1.msra.mxu0 0.0
        %1508 = vmatprep.subr.mxu0 0.0
        %1509 = vmatpush1.msra.mxu0 0.0
        %1510 = vmatprep.subr.mxu0 0.0
        %1511 = vmatpush1.msra.mxu0 0.0
        %1512 = vmatprep.subr.mxu0 0.0
        %1513 = vmatpush1.msra.mxu0 0.0
        %1514 = vmatprep.subr.mxu0 0.0
        %1515 = vmatpush1.msra.mxu0 0.0
        %1516 = vmatprep.subr.mxu0 0.0
        %1517 = vmatpush1.msra.mxu0 0.0
        %1518 = vmatprep.subr.mxu0 0.0
        %1519 = vmatpush1.msra.mxu0 0.0
        %1520 = vmatprep.subr.mxu0 0.0
        %1521 = vmatpush1.msra.mxu0 0.0
        %1522 = vmatprep.subr.mxu0 0.0
        %1523 = vmatpush1.msra.mxu0 0.0
        %1524 = vmatprep.subr.mxu0 0.0
        %1525 = vmatpush1.msra.mxu0 0.0
        %1526 = vmatprep.subr.mxu0 0.0
        %1527 = vmatpush1.msra.mxu0 0.0
        %1528 = vmatprep.subr.mxu0 0.0
        %1529 = vmatpush1.msra.mxu0 0.0
        %1530 = vmatprep.subr.mxu0 0.0
        %1531 = vmatpush1.msra.mxu0 0.0
        %1532 = vmatprep.subr.mxu0 0.0
        %1533 = vmatpush1.msra.mxu0 0.0
        %1534 = vmatprep.subr.mxu0 0.0
        %1535 = vmatpush1.msra.mxu0 0.0
        %1536 = vmatprep.subr.mxu0 0.0
        %1537 = vmatpush1.msra.mxu0 0.0
        %1538 = vmatprep.subr.mxu0 0.0
        %1539 = vmatpush1.msra.mxu0 0.0
        %1540 = vmatprep.mubr.f32.mxu0 0.0
        %1541 = vmatmul.mubr.f32.gmra.mrb[0].mxu0 %v1474
        %v1542 = vpop.f32.mrb[0].mxu0
        %v1543 = vadd.f32 0.0, %v1542
        %v1544 = vpop.f32.mrb[0].mxu0
        %1545 = vdwg.mxu0
        %v1547 = vsel %vm314, %v1034, 0
        %1549 = vmatprep.subr.mxu0 0.0
        %1550 = vmatpush1.msra.mxu0 %v312
        %1551 = vmatprep.subr.mxu0 0.0
        %1552 = vmatpush1.msra.mxu0 %v313
        %1553 = vmatprep.subr.mxu0 0.0
        %1554 = vmatpush1.msra.mxu0 0.0
        %1555 = vmatprep.subr.mxu0 0.0
        %1556 = vmatpush1.msra.mxu0 0.0
        %1557 = vmatprep.subr.mxu0 0.0
        %1558 = vmatpush1.msra.mxu0 0.0
        %1559 = vmatprep.subr.mxu0 0.0
        %1560 = vmatpush1.msra.mxu0 0.0
        %1561 = vmatprep.subr.mxu0 0.0
        %1562 = vmatpush1.msra.mxu0 0.0
        %1563 = vmatprep.subr.mxu0 0.0
        %1564 = vmatpush1.msra.mxu0 0.0
        %1565 = vmatprep.subr.mxu0 0.0
        %1566 = vmatpush1.msra.mxu0 0.0
        %1567 = vmatprep.subr.mxu0 0.0
        %1568 = vmatpush1.msra.mxu0 0.0
        %1569 = vmatprep.subr.mxu0 0.0
        %1570 = vmatpush1.msra.mxu0 0.0
        %1571 = vmatprep.subr.mxu0 0.0
        %1572 = vmatpush1.msra.mxu0 0.0
        %1573 = vmatprep.subr.mxu0 0.0
        %1574 = vmatpush1.msra.mxu0 0.0
        %1575 = vmatprep.subr.mxu0 0.0
        %1576 = vmatpush1.msra.mxu0 0.0
        %1577 = vmatprep.subr.mxu0 0.0
        %1578 = vmatpush1.msra.mxu0 0.0
        %1579 = vmatprep.subr.mxu0 0.0
        %1580 = vmatpush1.msra.mxu0 0.0
        %1581 = vmatprep.subr.mxu0 0.0
        %1582 = vmatpush1.msra.mxu0 0.0
        %1583 = vmatprep.subr.mxu0 0.0
        %1584 = vmatpush1.msra.mxu0 0.0
        %1585 = vmatprep.subr.mxu0 0.0
        %1586 = vmatpush1.msra.mxu0 0.0
        %1587 = vmatprep.subr.mxu0 0.0
        %1588 = vmatpush1.msra.mxu0 0.0
        %1589 = vmatprep.subr.mxu0 0.0
        %1590 = vmatpush1.msra.mxu0 0.0
        %1591 = vmatprep.subr.mxu0 0.0
        %1592 = vmatpush1.msra.mxu0 0.0
        %1593 = vmatprep.subr.mxu0 0.0
        %1594 = vmatpush1.msra.mxu0 0.0
        %1595 = vmatprep.subr.mxu0 0.0
        %1596 = vmatpush1.msra.mxu0 0.0
        %1597 = vmatprep.subr.mxu0 0.0
        %1598 = vmatpush1.msra.mxu0 0.0
        %1599 = vmatprep.subr.mxu0 0.0
        %1600 = vmatpush1.msra.mxu0 0.0
        %1601 = vmatprep.subr.mxu0 0.0
        %1602 = vmatpush1.msra.mxu0 0.0
        %1603 = vmatprep.subr.mxu0 0.0
        %1604 = vmatpush1.msra.mxu0 0.0
        %1605 = vmatprep.subr.mxu0 0.0
        %1606 = vmatpush1.msra.mxu0 0.0
        %1607 = vmatprep.subr.mxu0 0.0
        %1608 = vmatpush1.msra.mxu0 0.0
        %1609 = vmatprep.subr.mxu0 0.0
        %1610 = vmatpush1.msra.mxu0 0.0
        %1611 = vmatprep.subr.mxu0 0.0
        %1612 = vmatpush1.msra.mxu0 0.0
        %1613 = vmatprep.mubr.f32.mxu0 0.0
        %1614 = vmatmul.mubr.f32.gmra.mrb[0].mxu0 %v1547
        %v1615 = vpop.f32.mrb[0].mxu0
        %v1616 = vadd.f32 0.0, %v1615
        %v1617 = vpop.f32.mrb[0].mxu0
        %1618 = vdwg.mxu0
        %1619 = vst.msk [vmem:[%s265] sm:$0xff] %vm314, %v1105
        %1621 = vrot.lane.b32.xlu0 %v1178, 16
        %v1622 = vpop.permute.xlu0 %1621
        %vm1624 = vcmask 261248
        %1625 = vst.msk [vmem:[%s265] sm:$0xff] %vm1624, %v1622
        %1627 = vrot.lane.b32.xlu0 %v1251, 32
        %v1628 = vpop.permute.xlu0 %1627
        %vm1630 = vcmask 392448
        %1631 = vst.msk [vmem:[%s265] sm:$0xff] %vm1630, %v1628
        %1633 = vrot.lane.b32.xlu0 %v1324, 48
        %v1634 = vpop.permute.xlu0 %1633
        %vm1636 = vcmask 523648
        %1637 = vst.msk [vmem:[%s265] sm:$0xff] %vm1636, %v1634
        %1639 = vrot.lane.b32.xlu0 %v1397, 64
        %v1640 = vpop.permute.xlu0 %1639
        %vm1642 = vcmask 654848
        %1643 = vst.msk [vmem:[%s265] sm:$0xff] %vm1642, %v1640
        %1645 = vrot.lane.b32.xlu0 %v1470, 80
        %v1646 = vpop.permute.xlu0 %1645
        %vm1648 = vcmask 786048
        %1649 = vst.msk [vmem:[%s265] sm:$0xff] %vm1648, %v1646
        %1651 = vrot.lane.b32.xlu0 %v1543, 96
        %v1652 = vpop.permute.xlu0 %1651
        %vm1654 = vcmask 917248
        %1655 = vst.msk [vmem:[%s265] sm:$0xff] %vm1654, %v1652
        %1657 = vrot.lane.b32.xlu0 %v1616, 112
        %v1658 = vpop.permute.xlu0 %1657
        %vm1660 = vcmask 1048448
        %1661 = vst.msk [vmem:[%s265] sm:$0xff] %vm1660, %v1658
        %s1662 = sand.u32 %s109, 1
        %s1663 = scalar_lea.sflag [#allocation4], %s1662
        %s1664 = sand.u32 %s109, 1
        %s1665 = smul.addr %s1664, 8
        %s1666 = scalar_lea.vmem [#allocation8], %s1665
        // Predicated region
        $region45: #{tpu_custom_call.1} parent=31 // pred_check
          %p1667 = pneg %p119
        $region46: #{tpu_custom_call.1} parent=31 // pred_check_branch
          %1669 = sbr.rel (%p1667) target = $region48
        $region47: #{tpu_custom_call.1} parent=31 // pred_region
          %s1671 = ssub.s32 128, 128
          %1672 = vsyncadd %s1663, %s1671
          %s1673 = smul.addr %s23, 128
          %s1674 = scalar_lea.hbm %s3, %s1673
          %s1676 = sshll.u32 %s1666, 4
          %s1677 = int_to_ptr.vmem [resolvable:$true] %s1676
          %1679 = dma.vmem_to_hbm [thread:$0]  %s1677, 128, %s1674, %s1663
        $region48: #{tpu_custom_call.1} parent=31 // pred_fallthru
          _
      $region32: #{tpu_custom_call.1} parent=5 // pred_fallthru
        _
      %p1680 = scmp.le.s32.totalorder 2, %s18
      // Predicated region
      $region49: #{tpu_custom_call.1} parent=5 // pred_check
        %p1681 = pneg %p1680
      $region50: #{tpu_custom_call.1} parent=5 // pred_check_branch
        %1683 = sbr.rel (%p1681) target = $region52
      $region51: #{tpu_custom_call.1} parent=5 // pred_region
        %s1684 = ssub.s32 %s18, 2
        // Predicated region
        $region53: #{tpu_custom_call.1} parent=51 // pred_check
          %p1685 = pneg %p125
        $region54: #{tpu_custom_call.1} parent=51 // pred_check_branch
          %1687 = sbr.rel (%p1685) target = $region56
        $region55: #{tpu_custom_call.1} parent=51 // pred_region
          %s1688 = sand.u32 %s110, 1
          %s1689 = scalar_lea.sflag [#allocation4], %s1688
          %s1690 = sand.u32 %s110, 1
          %s1691 = smul.addr %s1690, 8
          %s1692 = scalar_lea.vmem [#allocation8], %s1691
          %1693 = dma.done %s1689, 128
        $region56: #{tpu_custom_call.1} parent=51 // pred_fallthru
          _
      $region52: #{tpu_custom_call.1} parent=5 // pred_fallthru
        _
    $region6: #{tpu_custom_call.1} parent=1 // loop_footer
      %s22 = sadd.s32 1, %s18
    $region7: #{tpu_custom_call.1} parent=1 // loop_footer_branch
      %17 = sbr.rel target = $region3
    $region8: #{tpu_custom_call.1} parent=1 // loop_exit
      _
    %1694 = vsyncpa [#allocation3], 1
    %s1695 = scalar_lea.sflag [#allocation3], 1
    %1696 = vsyncpa %s1695, 1
    %1697 = vsyncpa [#allocation6], 1
    %s1698 = scalar_lea.sflag [#allocation6], 1
    %1699 = vsyncpa %s1698, 1
    %1700 = vsyncpa [#allocation4], 1
    %s1701 = scalar_lea.sflag [#allocation4], 1
    %1702 = vsyncpa %s1701, 1

</llo_original>
